<compile_context>
chip_gen: v7x
topology: tpu7x:2x2x1
jax: 0.10.0
libtpu: 0.0.40
codegen_flags: <defaults>
</compile_context>

<pallas_src>
import jax
import jax.numpy as jnp
from jax.experimental import pallas as pl
from jax.experimental.pallas import tpu as pltpu


# ----------------------------------------------------------------------------
# Fused Pallas kernel: all LSTM layers + FC head in one invocation
# ----------------------------------------------------------------------------
def make_fused_lstm_kernel(num_layers):
    def kernel(*refs):
        # refs: x, (w_ih_t, w_hh_t, b) * num_layers, fc_w_t, fc_b, out
        x_ref = refs[0]
        layer_refs = [refs[1 + 3 * l: 4 + 3 * l] for l in range(num_layers)]
        fcw_ref = refs[1 + 3 * num_layers]
        fcb_ref = refs[2 + 3 * num_layers]
        out_ref = refs[3 + 3 * num_layers]

        B, T, D = x_ref.shape
        H = layer_refs[0][1].shape[0]

        # bf16 operands for the MXU (f32 accumulation via
        # preferred_element_type); gate math / cell state stay f32.
        x_bf = x_ref[...].astype(jnp.bfloat16)
        wih = [wr[...].astype(jnp.bfloat16) for (wr, _, _) in layer_refs]
        whh = [hr[...].astype(jnp.bfloat16) for (_, hr, _) in layer_refs]
        bias = [br[...] for (_, _, br) in layer_refs]

        # Hoisted layer-0 input projection + bias for ALL timesteps, kept as
        # (B, T, 4H) in VMEM.  Per-step access is pre0[:, t, :] — a static
        # slice, no batch-first -> time-major transpose on the serial path.
        pre0 = (jnp.dot(x_bf.reshape(B * T, D), wih[0],
                        preferred_element_type=jnp.float32)
                .reshape(B, T, 4 * H) + bias[0])

        h = [jnp.zeros((B, H), jnp.float32) for _ in range(num_layers)]
        c = [jnp.zeros((B, H), jnp.float32) for _ in range(num_layers)]

        def cell(gates, c_prev):
            # Gate columns are pre-permuted to [i, f, o, g]:
            # one sigmoid over 3H lanes + one tanh over H lanes per step.
            sig = jax.nn.sigmoid(gates[:, :3 * H])
            g_g = jnp.tanh(gates[:, 3 * H:])
            i_g = sig[:, 0 * H:1 * H]
            f_g = sig[:, 1 * H:2 * H]
            o_g = sig[:, 2 * H:3 * H]
            c_new = f_g * c_prev + i_g * g_g
            h_new = o_g * jnp.tanh(c_new)
            return h_new, c_new

        # Wavefront over layers inside a single fully-unrolled time loop
        # (T is small & static): layer l step t is issued right after
        # layer l-1 step t and is independent of layer l-1 step t+1, so the
        # scheduler can keep several small matmuls in flight.
        # NOTE: pltpu.matmul_push_rhs weight-stationary driving of W_hh is a
        # possible further win at real sizes; relying on Mosaic RHS reuse here.
        for t in range(T):
            for l in range(num_layers):
                if l == 0:
                    gates = pre0[:, t, :] + jnp.dot(
                        h[0].astype(jnp.bfloat16), whh[0],
                        preferred_element_type=jnp.float32)
                else:
                    gates = (jnp.dot(h[l - 1].astype(jnp.bfloat16), wih[l],
                                     preferred_element_type=jnp.float32)
                             + jnp.dot(h[l].astype(jnp.bfloat16), whh[l],
                                       preferred_element_type=jnp.float32)
                             + bias[l])
                h[l], c[l] = cell(gates, c[l])

        # FC head on the last layer's last-timestep hidden state (single tiny
        # f32 matmul, off the recurrence critical path).
        out_ref[...] = (jnp.dot(h[-1], fcw_ref[...],
                                preferred_element_type=jnp.float32)
                        + fcb_ref[...]).astype(out_ref.dtype)

    return kernel


# ----------------------------------------------------------------------------
# Wrapper
# ----------------------------------------------------------------------------
@jax.jit
def lstm_model_forward(x, params):
    """x: (B, T, input_size), batch_first like the PyTorch module."""
    num_layers = len(params["layers"])
    B = x.shape[0]
    num_classes = params["fc_w_t"].shape[1]

    args = [x]
    for (w_ih_t, w_hh_t, b) in params["layers"]:
        args += [w_ih_t, w_hh_t, b]
    args += [params["fc_w_t"], params["fc_b"]]

    return pl.pallas_call(
        make_fused_lstm_kernel(num_layers),
        out_shape=jax.ShapeDtypeStruct((B, num_classes), jnp.float32),
    )(*args)


# ----------------------------------------------------------------------------
# Parameter init (PyTorch layout, gate order [i, f, g, o]) + kernel prep
# ----------------------------------------------------------------------------
def init_params(key, input_size, hidden_size, num_layers, num_classes):
    """Raw nn.LSTM / nn.Linear - style parameters."""
    raw = {"layers": []}
    bound = 1.0 / jnp.sqrt(hidden_size)
    for layer in range(num_layers):
        d_in = input_size if layer == 0 else hidden_size
        key, k1, k2, k3, k4 = jax.random.split(key, 5)
        w_ih = jax.random.uniform(k1, (4 * hidden_size, d_in), jnp.float32,
                                  -bound, bound)
        w_hh = jax.random.uniform(k2, (4 * hidden_size, hidden_size),
                                  jnp.float32, -bound, bound)
        b_ih = jax.random.uniform(k3, (4 * hidden_size,), jnp.float32,
                                  -bound, bound)
        b_hh = jax.random.uniform(k4, (4 * hidden_size,), jnp.float32,
                                  -bound, bound)
        raw["layers"].append((w_ih, w_hh, b_ih, b_hh))
    key, k1, k2 = jax.random.split(key, 3)
    raw["fc_w"] = jax.random.uniform(k1, (num_classes, hidden_size),
                                     jnp.float32, -bound, bound)
    raw["fc_b"] = jax.random.uniform(k2, (num_classes,), jnp.float32,
                                     -bound, bound)
    return raw


def prepare_kernel_params(raw, hidden_size):
    """Permute gates [i,f,g,o] -> [i,f,o,g], transpose weights, fold biases."""
    H = hidden_size
    perm = jnp.concatenate([jnp.arange(0, H), jnp.arange(H, 2 * H),
                            jnp.arange(3 * H, 4 * H), jnp.arange(2 * H, 3 * H)])
    layers = []
    for (w_ih, w_hh, b_ih, b_hh) in raw["layers"]:
        layers.append((w_ih[perm].T,                       # (d_in, 4H)
                       w_hh[perm].T,                       # (H, 4H)
                       (b_ih + b_hh)[perm].reshape(1, 4 * H)))
    return {"layers": layers,
            "fc_w_t": raw["fc_w"].T,                       # (H, C)
            "fc_b": raw["fc_b"].reshape(1, -1)}            # (1, C)


# Pure-JAX f32 reference (lax.scan, PyTorch gate order) for correctness.
def reference_forward(x, raw, hidden_size):
    h_seq = jnp.transpose(x, (1, 0, 2))        # (T, B, D)
    B = x.shape[0]
    H = hidden_size
    for (w_ih, w_hh, b_ih, b_hh) in raw["layers"]:
        def step(carry, xt):
            h, c = carry
            gates = xt @ w_ih.T + h @ w_hh.T + b_ih + b_hh
            i = jax.nn.sigmoid(gates[:, :H])
            f = jax.nn.sigmoid(gates[:, H:2 * H])
            g = jnp.tanh(gates[:, 2 * H:3 * H])
            o = jax.nn.sigmoid(gates[:, 3 * H:])
            c = f * c + i * g
            h = o * jnp.tanh(c)
            return (h, c), h
        init = (jnp.zeros((B, H), jnp.float32),
                jnp.zeros((B, H), jnp.float32))
        _, h_seq = jax.lax.scan(step, init, h_seq)
    return h_seq[-1] @ raw["fc_w"].T + raw["fc_b"]


# ----------------------------------------------------------------------------
if __name__ == "__main__":
    B, T = 2, 8
    input_size, hidden_size, num_layers, num_classes = 16, 32, 2, 10

    key = jax.random.PRNGKey(0)
    key, kx = jax.random.split(key)
    x = jax.random.normal(kx, (B, T, input_size), jnp.float32)

    raw_params = init_params(key, input_size, hidden_size, num_layers,
                             num_classes)
    kernel_params = prepare_kernel_params(raw_params, hidden_size)

    out = lstm_model_forward(x, kernel_params)
    out = jax.block_until_ready(out)
    assert out.shape == (B, num_classes), out.shape

    ref = reference_forward(x, raw_params, hidden_size)
    max_err = float(jnp.max(jnp.abs(out - ref)))
    # bf16 MXU operands (f32 accumulation) -> loosened tolerance vs f32 ref.
    assert jnp.allclose(out, ref, atol=3e-2, rtol=3e-2), max_err

    print("KERNEL_OK")
</pallas_src>

<mosaic_0001>
module attributes {stable_mosaic.version = 11 : i64} {
  func.func @kernel(%arg0: memref<2x8x16xf32, #tpu.memory_space<vmem>>, %arg1: memref<16x128xf32, #tpu.memory_space<vmem>>, %arg2: memref<32x128xf32, #tpu.memory_space<vmem>>, %arg3: memref<1x128xf32, #tpu.memory_space<vmem>>, %arg4: memref<32x128xf32, #tpu.memory_space<vmem>>, %arg5: memref<32x128xf32, #tpu.memory_space<vmem>>, %arg6: memref<1x128xf32, #tpu.memory_space<vmem>>, %arg7: memref<32x10xf32, #tpu.memory_space<vmem>>, %arg8: memref<1x10xf32, #tpu.memory_space<vmem>>, %arg9: memref<2x10xf32, #tpu.memory_space<vmem>>) attributes {dimension_semantics = [], scalar_prefetch = 0 : i64, scratch_operands = 0 : i64, tpu.core_type = #tpu.core_type<tc>} {
    %c0 = arith.constant 0 : index
    %c0_0 = arith.constant 0 : index
    %c0_1 = arith.constant 0 : index
    %0 = vector.load %arg0[%c0, %c0_0, %c0_1] : memref<2x8x16xf32, #tpu.memory_space<vmem>>, vector<2x8x16xf32>
    %1 = arith.truncf %0 : vector<2x8x16xf32> to vector<2x8x16xbf16>
    %c0_2 = arith.constant 0 : index
    %c0_3 = arith.constant 0 : index
    %2 = vector.load %arg1[%c0_2, %c0_3] : memref<16x128xf32, #tpu.memory_space<vmem>>, vector<16x128xf32>
    %3 = arith.truncf %2 : vector<16x128xf32> to vector<16x128xbf16>
    %c0_4 = arith.constant 0 : index
    %c0_5 = arith.constant 0 : index
    %4 = vector.load %arg4[%c0_4, %c0_5] : memref<32x128xf32, #tpu.memory_space<vmem>>, vector<32x128xf32>
    %5 = arith.truncf %4 : vector<32x128xf32> to vector<32x128xbf16>
    %c0_6 = arith.constant 0 : index
    %c0_7 = arith.constant 0 : index
    %6 = vector.load %arg2[%c0_6, %c0_7] : memref<32x128xf32, #tpu.memory_space<vmem>>, vector<32x128xf32>
    %7 = arith.truncf %6 : vector<32x128xf32> to vector<32x128xbf16>
    %c0_8 = arith.constant 0 : index
    %c0_9 = arith.constant 0 : index
    %8 = vector.load %arg5[%c0_8, %c0_9] : memref<32x128xf32, #tpu.memory_space<vmem>>, vector<32x128xf32>
    %9 = arith.truncf %8 : vector<32x128xf32> to vector<32x128xbf16>
    %c0_10 = arith.constant 0 : index
    %c0_11 = arith.constant 0 : index
    %10 = vector.load %arg3[%c0_10, %c0_11] : memref<1x128xf32, #tpu.memory_space<vmem>>, vector<1x128xf32>
    %c0_12 = arith.constant 0 : index
    %c0_13 = arith.constant 0 : index
    %11 = vector.load %arg6[%c0_12, %c0_13] : memref<1x128xf32, #tpu.memory_space<vmem>>, vector<1x128xf32>
    %12 = vector.shape_cast %1 : vector<2x8x16xbf16> to vector<16x16xbf16>
    %cst = arith.constant dense<0.000000e+00> : vector<16x128xf32>
    %13 = tpu.matmul %12, %3, %cst {dimension_numbers = #tpu.dot_dimension_numbers<[1], [0], [0], [1], [0, 0, 1, 1], [], []>} : vector<16x16xbf16>, vector<16x128xbf16>, vector<16x128xf32> -> vector<16x128xf32>
    %14 = vector.shape_cast %13 : vector<16x128xf32> to vector<2x8x128xf32>
    %15 = vector.shape_cast %10 : vector<1x128xf32> to vector<1x1x128xf32>
    %16 = vector.broadcast %15 : vector<1x1x128xf32> to vector<2x8x128xf32>
    %17 = arith.addf %14, %16 : vector<2x8x128xf32>
    %cst_14 = arith.constant 0.000000e+00 : f32
    %18 = vector.broadcast %cst_14 : f32 to vector<2x32xf32>
    %cst_15 = arith.constant 0.000000e+00 : f32
    %19 = vector.broadcast %cst_15 : f32 to vector<2x32xf32>
    %cst_16 = arith.constant 0.000000e+00 : f32
    %20 = vector.broadcast %cst_16 : f32 to vector<2x32xf32>
    %cst_17 = arith.constant 0.000000e+00 : f32
    %21 = vector.broadcast %cst_17 : f32 to vector<2x32xf32>
    %22 = vector.extract_strided_slice %17 {offsets = [0, 0, 0], sizes = [2, 1, 128], strides = [1, 1, 1]} : vector<2x8x128xf32> to vector<2x1x128xf32>
    %23 = vector.shape_cast %22 : vector<2x1x128xf32> to vector<2x128xf32>
    %24 = arith.truncf %18 : vector<2x32xf32> to vector<2x32xbf16>
    %cst_18 = arith.constant dense<0.000000e+00> : vector<2x128xf32>
    %25 = tpu.matmul %24, %7, %cst_18 {dimension_numbers = #tpu.dot_dimension_numbers<[1], [0], [0], [1], [0, 0, 1, 1], [], []>} : vector<2x32xbf16>, vector<32x128xbf16>, vector<2x128xf32> -> vector<2x128xf32>
    %26 = arith.addf %23, %25 : vector<2x128xf32>
    %27 = vector.extract_strided_slice %26 {offsets = [0, 0], sizes = [2, 96], strides = [1, 1]} : vector<2x128xf32> to vector<2x96xf32>
    %28 = arith.negf %27 : vector<2x96xf32>
    %29 = math.exp %28 : vector<2x96xf32>
    %cst_19 = arith.constant 1.000000e+00 : f32
    %30 = vector.broadcast %cst_19 : f32 to vector<2x96xf32>
    %31 = arith.addf %30, %29 : vector<2x96xf32>
    %32 = arith.divf %30, %31 : vector<2x96xf32>
    %33 = vector.extract_strided_slice %26 {offsets = [0, 96], sizes = [2, 32], strides = [1, 1]} : vector<2x128xf32> to vector<2x32xf32>
    %34 = math.tanh %33 : vector<2x32xf32>
    %35 = vector.extract_strided_slice %32 {offsets = [0, 0], sizes = [2, 32], strides = [1, 1]} : vector<2x96xf32> to vector<2x32xf32>
    %36 = vector.extract_strided_slice %32 {offsets = [0, 32], sizes = [2, 32], strides = [1, 1]} : vector<2x96xf32> to vector<2x32xf32>
    %37 = vector.extract_strided_slice %32 {offsets = [0, 64], sizes = [2, 32], strides = [1, 1]} : vector<2x96xf32> to vector<2x32xf32>
    %38 = arith.mulf %36, %20 : vector<2x32xf32>
    %39 = arith.mulf %35, %34 : vector<2x32xf32>
    %40 = arith.addf %38, %39 : vector<2x32xf32>
    %41 = math.tanh %40 : vector<2x32xf32>
    %42 = arith.mulf %37, %41 : vector<2x32xf32>
    %43 = arith.truncf %42 : vector<2x32xf32> to vector<2x32xbf16>
    %cst_20 = arith.constant dense<0.000000e+00> : vector<2x128xf32>
    %44 = tpu.matmul %43, %5, %cst_20 {dimension_numbers = #tpu.dot_dimension_numbers<[1], [0], [0], [1], [0, 0, 1, 1], [], []>} : vector<2x32xbf16>, vector<32x128xbf16>, vector<2x128xf32> -> vector<2x128xf32>
    %45 = arith.truncf %19 : vector<2x32xf32> to vector<2x32xbf16>
    %cst_21 = arith.constant dense<0.000000e+00> : vector<2x128xf32>
    %46 = tpu.matmul %45, %9, %cst_21 {dimension_numbers = #tpu.dot_dimension_numbers<[1], [0], [0], [1], [0, 0, 1, 1], [], []>} : vector<2x32xbf16>, vector<32x128xbf16>, vector<2x128xf32> -> vector<2x128xf32>
    %47 = arith.addf %44, %46 : vector<2x128xf32>
    %48 = vector.broadcast %11 : vector<1x128xf32> to vector<2x128xf32>
    %49 = arith.addf %47, %48 : vector<2x128xf32>
    %50 = vector.extract_strided_slice %49 {offsets = [0, 0], sizes = [2, 96], strides = [1, 1]} : vector<2x128xf32> to vector<2x96xf32>
    %51 = arith.negf %50 : vector<2x96xf32>
    %52 = math.exp %51 : vector<2x96xf32>
    %cst_22 = arith.constant 1.000000e+00 : f32
    %53 = vector.broadcast %cst_22 : f32 to vector<2x96xf32>
    %54 = arith.addf %53, %52 : vector<2x96xf32>
    %55 = arith.divf %53, %54 : vector<2x96xf32>
    %56 = vector.extract_strided_slice %49 {offsets = [0, 96], sizes = [2, 32], strides = [1, 1]} : vector<2x128xf32> to vector<2x32xf32>
    %57 = math.tanh %56 : vector<2x32xf32>
    %58 = vector.extract_strided_slice %55 {offsets = [0, 0], sizes = [2, 32], strides = [1, 1]} : vector<2x96xf32> to vector<2x32xf32>
    %59 = vector.extract_strided_slice %55 {offsets = [0, 32], sizes = [2, 32], strides = [1, 1]} : vector<2x96xf32> to vector<2x32xf32>
    %60 = vector.extract_strided_slice %55 {offsets = [0, 64], sizes = [2, 32], strides = [1, 1]} : vector<2x96xf32> to vector<2x32xf32>
    %61 = arith.mulf %59, %21 : vector<2x32xf32>
    %62 = arith.mulf %58, %57 : vector<2x32xf32>
    %63 = arith.addf %61, %62 : vector<2x32xf32>
    %64 = math.tanh %63 : vector<2x32xf32>
    %65 = arith.mulf %60, %64 : vector<2x32xf32>
    %66 = vector.extract_strided_slice %17 {offsets = [0, 1, 0], sizes = [2, 1, 128], strides = [1, 1, 1]} : vector<2x8x128xf32> to vector<2x1x128xf32>
    %67 = vector.shape_cast %66 : vector<2x1x128xf32> to vector<2x128xf32>
    %68 = arith.truncf %42 : vector<2x32xf32> to vector<2x32xbf16>
    %cst_23 = arith.constant dense<0.000000e+00> : vector<2x128xf32>
    %69 = tpu.matmul %68, %7, %cst_23 {dimension_numbers = #tpu.dot_dimension_numbers<[1], [0], [0], [1], [0, 0, 1, 1], [], []>} : vector<2x32xbf16>, vector<32x128xbf16>, vector<2x128xf32> -> vector<2x128xf32>
    %70 = arith.addf %67, %69 : vector<2x128xf32>
    %71 = vector.extract_strided_slice %70 {offsets = [0, 0], sizes = [2, 96], strides = [1, 1]} : vector<2x128xf32> to vector<2x96xf32>
    %72 = arith.negf %71 : vector<2x96xf32>
    %73 = math.exp %72 : vector<2x96xf32>
    %cst_24 = arith.constant 1.000000e+00 : f32
    %74 = vector.broadcast %cst_24 : f32 to vector<2x96xf32>
    %75 = arith.addf %74, %73 : vector<2x96xf32>
    %76 = arith.divf %74, %75 : vector<2x96xf32>
    %77 = vector.extract_strided_slice %70 {offsets = [0, 96], sizes = [2, 32], strides = [1, 1]} : vector<2x128xf32> to vector<2x32xf32>
    %78 = math.tanh %77 : vector<2x32xf32>
    %79 = vector.extract_strided_slice %76 {offsets = [0, 0], sizes = [2, 32], strides = [1, 1]} : vector<2x96xf32> to vector<2x32xf32>
    %80 = vector.extract_strided_slice %76 {offsets = [0, 32], sizes = [2, 32], strides = [1, 1]} : vector<2x96xf32> to vector<2x32xf32>
    %81 = vector.extract_strided_slice %76 {offsets = [0, 64], sizes = [2, 32], strides = [1, 1]} : vector<2x96xf32> to vector<2x32xf32>
    %82 = arith.mulf %80, %40 : vector<2x32xf32>
    %83 = arith.mulf %79, %78 : vector<2x32xf32>
    %84 = arith.addf %82, %83 : vector<2x32xf32>
    %85 = math.tanh %84 : vector<2x32xf32>
    %86 = arith.mulf %81, %85 : vector<2x32xf32>
    %87 = arith.truncf %86 : vector<2x32xf32> to vector<2x32xbf16>
    %cst_25 = arith.constant dense<0.000000e+00> : vector<2x128xf32>
    %88 = tpu.matmul %87, %5, %cst_25 {dimension_numbers = #tpu.dot_dimension_numbers<[1], [0], [0], [1], [0, 0, 1, 1], [], []>} : vector<2x32xbf16>, vector<32x128xbf16>, vector<2x128xf32> -> vector<2x128xf32>
    %89 = arith.truncf %65 : vector<2x32xf32> to vector<2x32xbf16>
    %cst_26 = arith.constant dense<0.000000e+00> : vector<2x128xf32>
    %90 = tpu.matmul %89, %9, %cst_26 {dimension_numbers = #tpu.dot_dimension_numbers<[1], [0], [0], [1], [0, 0, 1, 1], [], []>} : vector<2x32xbf16>, vector<32x128xbf16>, vector<2x128xf32> -> vector<2x128xf32>
    %91 = arith.addf %88, %90 : vector<2x128xf32>
    %92 = vector.broadcast %11 : vector<1x128xf32> to vector<2x128xf32>
    %93 = arith.addf %91, %92 : vector<2x128xf32>
    %94 = vector.extract_strided_slice %93 {offsets = [0, 0], sizes = [2, 96], strides = [1, 1]} : vector<2x128xf32> to vector<2x96xf32>
    %95 = arith.negf %94 : vector<2x96xf32>
    %96 = math.exp %95 : vector<2x96xf32>
    %cst_27 = arith.constant 1.000000e+00 : f32
    %97 = vector.broadcast %cst_27 : f32 to vector<2x96xf32>
    %98 = arith.addf %97, %96 : vector<2x96xf32>
    %99 = arith.divf %97, %98 : vector<2x96xf32>
    %100 = vector.extract_strided_slice %93 {offsets = [0, 96], sizes = [2, 32], strides = [1, 1]} : vector<2x128xf32> to vector<2x32xf32>
    %101 = math.tanh %100 : vector<2x32xf32>
    %102 = vector.extract_strided_slice %99 {offsets = [0, 0], sizes = [2, 32], strides = [1, 1]} : vector<2x96xf32> to vector<2x32xf32>
    %103 = vector.extract_strided_slice %99 {offsets = [0, 32], sizes = [2, 32], strides = [1, 1]} : vector<2x96xf32> to vector<2x32xf32>
    %104 = vector.extract_strided_slice %99 {offsets = [0, 64], sizes = [2, 32], strides = [1, 1]} : vector<2x96xf32> to vector<2x32xf32>
    %105 = arith.mulf %103, %63 : vector<2x32xf32>
    %106 = arith.mulf %102, %101 : vector<2x32xf32>
    %107 = arith.addf %105, %106 : vector<2x32xf32>
    %108 = math.tanh %107 : vector<2x32xf32>
    %109 = arith.mulf %104, %108 : vector<2x32xf32>
    %110 = vector.extract_strided_slice %17 {offsets = [0, 2, 0], sizes = [2, 1, 128], strides = [1, 1, 1]} : vector<2x8x128xf32> to vector<2x1x128xf32>
    %111 = vector.shape_cast %110 : vector<2x1x128xf32> to vector<2x128xf32>
    %112 = arith.truncf %86 : vector<2x32xf32> to vector<2x32xbf16>
    %cst_28 = arith.constant dense<0.000000e+00> : vector<2x128xf32>
    %113 = tpu.matmul %112, %7, %cst_28 {dimension_numbers = #tpu.dot_dimension_numbers<[1], [0], [0], [1], [0, 0, 1, 1], [], []>} : vector<2x32xbf16>, vector<32x128xbf16>, vector<2x128xf32> -> vector<2x128xf32>
    %114 = arith.addf %111, %113 : vector<2x128xf32>
    %115 = vector.extract_strided_slice %114 {offsets = [0, 0], sizes = [2, 96], strides = [1, 1]} : vector<2x128xf32> to vector<2x96xf32>
    %116 = arith.negf %115 : vector<2x96xf32>
    %117 = math.exp %116 : vector<2x96xf32>
    %cst_29 = arith.constant 1.000000e+00 : f32
    %118 = vector.broadcast %cst_29 : f32 to vector<2x96xf32>
    %119 = arith.addf %118, %117 : vector<2x96xf32>
    %120 = arith.divf %118, %119 : vector<2x96xf32>
    %121 = vector.extract_strided_slice %114 {offsets = [0, 96], sizes = [2, 32], strides = [1, 1]} : vector<2x128xf32> to vector<2x32xf32>
    %122 = math.tanh %121 : vector<2x32xf32>
    %123 = vector.extract_strided_slice %120 {offsets = [0, 0], sizes = [2, 32], strides = [1, 1]} : vector<2x96xf32> to vector<2x32xf32>
    %124 = vector.extract_strided_slice %120 {offsets = [0, 32], sizes = [2, 32], strides = [1, 1]} : vector<2x96xf32> to vector<2x32xf32>
    %125 = vector.extract_strided_slice %120 {offsets = [0, 64], sizes = [2, 32], strides = [1, 1]} : vector<2x96xf32> to vector<2x32xf32>
    %126 = arith.mulf %124, %84 : vector<2x32xf32>
    %127 = arith.mulf %123, %122 : vector<2x32xf32>
    %128 = arith.addf %126, %127 : vector<2x32xf32>
    %129 = math.tanh %128 : vector<2x32xf32>
    %130 = arith.mulf %125, %129 : vector<2x32xf32>
    %131 = arith.truncf %130 : vector<2x32xf32> to vector<2x32xbf16>
    %cst_30 = arith.constant dense<0.000000e+00> : vector<2x128xf32>
    %132 = tpu.matmul %131, %5, %cst_30 {dimension_numbers = #tpu.dot_dimension_numbers<[1], [0], [0], [1], [0, 0, 1, 1], [], []>} : vector<2x32xbf16>, vector<32x128xbf16>, vector<2x128xf32> -> vector<2x128xf32>
    %133 = arith.truncf %109 : vector<2x32xf32> to vector<2x32xbf16>
    %cst_31 = arith.constant dense<0.000000e+00> : vector<2x128xf32>
    %134 = tpu.matmul %133, %9, %cst_31 {dimension_numbers = #tpu.dot_dimension_numbers<[1], [0], [0], [1], [0, 0, 1, 1], [], []>} : vector<2x32xbf16>, vector<32x128xbf16>, vector<2x128xf32> -> vector<2x128xf32>
    %135 = arith.addf %132, %134 : vector<2x128xf32>
    %136 = vector.broadcast %11 : vector<1x128xf32> to vector<2x128xf32>
    %137 = arith.addf %135, %136 : vector<2x128xf32>
    %138 = vector.extract_strided_slice %137 {offsets = [0, 0], sizes = [2, 96], strides = [1, 1]} : vector<2x128xf32> to vector<2x96xf32>
    %139 = arith.negf %138 : vector<2x96xf32>
    %140 = math.exp %139 : vector<2x96xf32>
    %cst_32 = arith.constant 1.000000e+00 : f32
    %141 = vector.broadcast %cst_32 : f32 to vector<2x96xf32>
    %142 = arith.addf %141, %140 : vector<2x96xf32>
    %143 = arith.divf %141, %142 : vector<2x96xf32>
    %144 = vector.extract_strided_slice %137 {offsets = [0, 96], sizes = [2, 32], strides = [1, 1]} : vector<2x128xf32> to vector<2x32xf32>
    %145 = math.tanh %144 : vector<2x32xf32>
    %146 = vector.extract_strided_slice %143 {offsets = [0, 0], sizes = [2, 32], strides = [1, 1]} : vector<2x96xf32> to vector<2x32xf32>
    %147 = vector.extract_strided_slice %143 {offsets = [0, 32], sizes = [2, 32], strides = [1, 1]} : vector<2x96xf32> to vector<2x32xf32>
    %148 = vector.extract_strided_slice %143 {offsets = [0, 64], sizes = [2, 32], strides = [1, 1]} : vector<2x96xf32> to vector<2x32xf32>
    %149 = arith.mulf %147, %107 : vector<2x32xf32>
    %150 = arith.mulf %146, %145 : vector<2x32xf32>
    %151 = arith.addf %149, %150 : vector<2x32xf32>
    %152 = math.tanh %151 : vector<2x32xf32>
    %153 = arith.mulf %148, %152 : vector<2x32xf32>
    %154 = vector.extract_strided_slice %17 {offsets = [0, 3, 0], sizes = [2, 1, 128], strides = [1, 1, 1]} : vector<2x8x128xf32> to vector<2x1x128xf32>
    %155 = vector.shape_cast %154 : vector<2x1x128xf32> to vector<2x128xf32>
    %156 = arith.truncf %130 : vector<2x32xf32> to vector<2x32xbf16>
    %cst_33 = arith.constant dense<0.000000e+00> : vector<2x128xf32>
    %157 = tpu.matmul %156, %7, %cst_33 {dimension_numbers = #tpu.dot_dimension_numbers<[1], [0], [0], [1], [0, 0, 1, 1], [], []>} : vector<2x32xbf16>, vector<32x128xbf16>, vector<2x128xf32> -> vector<2x128xf32>
    %158 = arith.addf %155, %157 : vector<2x128xf32>
    %159 = vector.extract_strided_slice %158 {offsets = [0, 0], sizes = [2, 96], strides = [1, 1]} : vector<2x128xf32> to vector<2x96xf32>
    %160 = arith.negf %159 : vector<2x96xf32>
    %161 = math.exp %160 : vector<2x96xf32>
    %cst_34 = arith.constant 1.000000e+00 : f32
    %162 = vector.broadcast %cst_34 : f32 to vector<2x96xf32>
    %163 = arith.addf %162, %161 : vector<2x96xf32>
    %164 = arith.divf %162, %163 : vector<2x96xf32>
    %165 = vector.extract_strided_slice %158 {offsets = [0, 96], sizes = [2, 32], strides = [1, 1]} : vector<2x128xf32> to vector<2x32xf32>
    %166 = math.tanh %165 : vector<2x32xf32>
    %167 = vector.extract_strided_slice %164 {offsets = [0, 0], sizes = [2, 32], strides = [1, 1]} : vector<2x96xf32> to vector<2x32xf32>
    %168 = vector.extract_strided_slice %164 {offsets = [0, 32], sizes = [2, 32], strides = [1, 1]} : vector<2x96xf32> to vector<2x32xf32>
    %169 = vector.extract_strided_slice %164 {offsets = [0, 64], sizes = [2, 32], strides = [1, 1]} : vector<2x96xf32> to vector<2x32xf32>
    %170 = arith.mulf %168, %128 : vector<2x32xf32>
    %171 = arith.mulf %167, %166 : vector<2x32xf32>
    %172 = arith.addf %170, %171 : vector<2x32xf32>
    %173 = math.tanh %172 : vector<2x32xf32>
    %174 = arith.mulf %169, %173 : vector<2x32xf32>
    %175 = arith.truncf %174 : vector<2x32xf32> to vector<2x32xbf16>
    %cst_35 = arith.constant dense<0.000000e+00> : vector<2x128xf32>
    %176 = tpu.matmul %175, %5, %cst_35 {dimension_numbers = #tpu.dot_dimension_numbers<[1], [0], [0], [1], [0, 0, 1, 1], [], []>} : vector<2x32xbf16>, vector<32x128xbf16>, vector<2x128xf32> -> vector<2x128xf32>
    %177 = arith.truncf %153 : vector<2x32xf32> to vector<2x32xbf16>
    %cst_36 = arith.constant dense<0.000000e+00> : vector<2x128xf32>
    %178 = tpu.matmul %177, %9, %cst_36 {dimension_numbers = #tpu.dot_dimension_numbers<[1], [0], [0], [1], [0, 0, 1, 1], [], []>} : vector<2x32xbf16>, vector<32x128xbf16>, vector<2x128xf32> -> vector<2x128xf32>
    %179 = arith.addf %176, %178 : vector<2x128xf32>
    %180 = vector.broadcast %11 : vector<1x128xf32> to vector<2x128xf32>
    %181 = arith.addf %179, %180 : vector<2x128xf32>
    %182 = vector.extract_strided_slice %181 {offsets = [0, 0], sizes = [2, 96], strides = [1, 1]} : vector<2x128xf32> to vector<2x96xf32>
    %183 = arith.negf %182 : vector<2x96xf32>
    %184 = math.exp %183 : vector<2x96xf32>
    %cst_37 = arith.constant 1.000000e+00 : f32
    %185 = vector.broadcast %cst_37 : f32 to vector<2x96xf32>
    %186 = arith.addf %185, %184 : vector<2x96xf32>
    %187 = arith.divf %185, %186 : vector<2x96xf32>
    %188 = vector.extract_strided_slice %181 {offsets = [0, 96], sizes = [2, 32], strides = [1, 1]} : vector<2x128xf32> to vector<2x32xf32>
    %189 = math.tanh %188 : vector<2x32xf32>
    %190 = vector.extract_strided_slice %187 {offsets = [0, 0], sizes = [2, 32], strides = [1, 1]} : vector<2x96xf32> to vector<2x32xf32>
    %191 = vector.extract_strided_slice %187 {offsets = [0, 32], sizes = [2, 32], strides = [1, 1]} : vector<2x96xf32> to vector<2x32xf32>
    %192 = vector.extract_strided_slice %187 {offsets = [0, 64], sizes = [2, 32], strides = [1, 1]} : vector<2x96xf32> to vector<2x32xf32>
    %193 = arith.mulf %191, %151 : vector<2x32xf32>
    %194 = arith.mulf %190, %189 : vector<2x32xf32>
    %195 = arith.addf %193, %194 : vector<2x32xf32>
    %196 = math.tanh %195 : vector<2x32xf32>
    %197 = arith.mulf %192, %196 : vector<2x32xf32>
    %198 = vector.extract_strided_slice %17 {offsets = [0, 4, 0], sizes = [2, 1, 128], strides = [1, 1, 1]} : vector<2x8x128xf32> to vector<2x1x128xf32>
    %199 = vector.shape_cast %198 : vector<2x1x128xf32> to vector<2x128xf32>
    %200 = arith.truncf %174 : vector<2x32xf32> to vector<2x32xbf16>
    %cst_38 = arith.constant dense<0.000000e+00> : vector<2x128xf32>
    %201 = tpu.matmul %200, %7, %cst_38 {dimension_numbers = #tpu.dot_dimension_numbers<[1], [0], [0], [1], [0, 0, 1, 1], [], []>} : vector<2x32xbf16>, vector<32x128xbf16>, vector<2x128xf32> -> vector<2x128xf32>
    %202 = arith.addf %199, %201 : vector<2x128xf32>
    %203 = vector.extract_strided_slice %202 {offsets = [0, 0], sizes = [2, 96], strides = [1, 1]} : vector<2x128xf32> to vector<2x96xf32>
    %204 = arith.negf %203 : vector<2x96xf32>
    %205 = math.exp %204 : vector<2x96xf32>
    %cst_39 = arith.constant 1.000000e+00 : f32
    %206 = vector.broadcast %cst_39 : f32 to vector<2x96xf32>
    %207 = arith.addf %206, %205 : vector<2x96xf32>
    %208 = arith.divf %206, %207 : vector<2x96xf32>
    %209 = vector.extract_strided_slice %202 {offsets = [0, 96], sizes = [2, 32], strides = [1, 1]} : vector<2x128xf32> to vector<2x32xf32>
    %210 = math.tanh %209 : vector<2x32xf32>
    %211 = vector.extract_strided_slice %208 {offsets = [0, 0], sizes = [2, 32], strides = [1, 1]} : vector<2x96xf32> to vector<2x32xf32>
    %212 = vector.extract_strided_slice %208 {offsets = [0, 32], sizes = [2, 32], strides = [1, 1]} : vector<2x96xf32> to vector<2x32xf32>
    %213 = vector.extract_strided_slice %208 {offsets = [0, 64], sizes = [2, 32], strides = [1, 1]} : vector<2x96xf32> to vector<2x32xf32>
    %214 = arith.mulf %212, %172 : vector<2x32xf32>
    %215 = arith.mulf %211, %210 : vector<2x32xf32>
    %216 = arith.addf %214, %215 : vector<2x32xf32>
    %217 = math.tanh %216 : vector<2x32xf32>
    %218 = arith.mulf %213, %217 : vector<2x32xf32>
    %219 = arith.truncf %218 : vector<2x32xf32> to vector<2x32xbf16>
    %cst_40 = arith.constant dense<0.000000e+00> : vector<2x128xf32>
    %220 = tpu.matmul %219, %5, %cst_40 {dimension_numbers = #tpu.dot_dimension_numbers<[1], [0], [0], [1], [0, 0, 1, 1], [], []>} : vector<2x32xbf16>, vector<32x128xbf16>, vector<2x128xf32> -> vector<2x128xf32>
    %221 = arith.truncf %197 : vector<2x32xf32> to vector<2x32xbf16>
    %cst_41 = arith.constant dense<0.000000e+00> : vector<2x128xf32>
    %222 = tpu.matmul %221, %9, %cst_41 {dimension_numbers = #tpu.dot_dimension_numbers<[1], [0], [0], [1], [0, 0, 1, 1], [], []>} : vector<2x32xbf16>, vector<32x128xbf16>, vector<2x128xf32> -> vector<2x128xf32>
    %223 = arith.addf %220, %222 : vector<2x128xf32>
    %224 = vector.broadcast %11 : vector<1x128xf32> to vector<2x128xf32>
    %225 = arith.addf %223, %224 : vector<2x128xf32>
    %226 = vector.extract_strided_slice %225 {offsets = [0, 0], sizes = [2, 96], strides = [1, 1]} : vector<2x128xf32> to vector<2x96xf32>
    %227 = arith.negf %226 : vector<2x96xf32>
    %228 = math.exp %227 : vector<2x96xf32>
    %cst_42 = arith.constant 1.000000e+00 : f32
    %229 = vector.broadcast %cst_42 : f32 to vector<2x96xf32>
    %230 = arith.addf %229, %228 : vector<2x96xf32>
    %231 = arith.divf %229, %230 : vector<2x96xf32>
    %232 = vector.extract_strided_slice %225 {offsets = [0, 96], sizes = [2, 32], strides = [1, 1]} : vector<2x128xf32> to vector<2x32xf32>
    %233 = math.tanh %232 : vector<2x32xf32>
    %234 = vector.extract_strided_slice %231 {offsets = [0, 0], sizes = [2, 32], strides = [1, 1]} : vector<2x96xf32> to vector<2x32xf32>
    %235 = vector.extract_strided_slice %231 {offsets = [0, 32], sizes = [2, 32], strides = [1, 1]} : vector<2x96xf32> to vector<2x32xf32>
    %236 = vector.extract_strided_slice %231 {offsets = [0, 64], sizes = [2, 32], strides = [1, 1]} : vector<2x96xf32> to vector<2x32xf32>
    %237 = arith.mulf %235, %195 : vector<2x32xf32>
    %238 = arith.mulf %234, %233 : vector<2x32xf32>
    %239 = arith.addf %237, %238 : vector<2x32xf32>
    %240 = math.tanh %239 : vector<2x32xf32>
    %241 = arith.mulf %236, %240 : vector<2x32xf32>
    %242 = vector.extract_strided_slice %17 {offsets = [0, 5, 0], sizes = [2, 1, 128], strides = [1, 1, 1]} : vector<2x8x128xf32> to vector<2x1x128xf32>
    %243 = vector.shape_cast %242 : vector<2x1x128xf32> to vector<2x128xf32>
    %244 = arith.truncf %218 : vector<2x32xf32> to vector<2x32xbf16>
    %cst_43 = arith.constant dense<0.000000e+00> : vector<2x128xf32>
    %245 = tpu.matmul %244, %7, %cst_43 {dimension_numbers = #tpu.dot_dimension_numbers<[1], [0], [0], [1], [0, 0, 1, 1], [], []>} : vector<2x32xbf16>, vector<32x128xbf16>, vector<2x128xf32> -> vector<2x128xf32>
    %246 = arith.addf %243, %245 : vector<2x128xf32>
    %247 = vector.extract_strided_slice %246 {offsets = [0, 0], sizes = [2, 96], strides = [1, 1]} : vector<2x128xf32> to vector<2x96xf32>
    %248 = arith.negf %247 : vector<2x96xf32>
    %249 = math.exp %248 : vector<2x96xf32>
    %cst_44 = arith.constant 1.000000e+00 : f32
    %250 = vector.broadcast %cst_44 : f32 to vector<2x96xf32>
    %251 = arith.addf %250, %249 : vector<2x96xf32>
    %252 = arith.divf %250, %251 : vector<2x96xf32>
    %253 = vector.extract_strided_slice %246 {offsets = [0, 96], sizes = [2, 32], strides = [1, 1]} : vector<2x128xf32> to vector<2x32xf32>
    %254 = math.tanh %253 : vector<2x32xf32>
    %255 = vector.extract_strided_slice %252 {offsets = [0, 0], sizes = [2, 32], strides = [1, 1]} : vector<2x96xf32> to vector<2x32xf32>
    %256 = vector.extract_strided_slice %252 {offsets = [0, 32], sizes = [2, 32], strides = [1, 1]} : vector<2x96xf32> to vector<2x32xf32>
    %257 = vector.extract_strided_slice %252 {offsets = [0, 64], sizes = [2, 32], strides = [1, 1]} : vector<2x96xf32> to vector<2x32xf32>
    %258 = arith.mulf %256, %216 : vector<2x32xf32>
    %259 = arith.mulf %255, %254 : vector<2x32xf32>
    %260 = arith.addf %258, %259 : vector<2x32xf32>
    %261 = math.tanh %260 : vector<2x32xf32>
    %262 = arith.mulf %257, %261 : vector<2x32xf32>
    %263 = arith.truncf %262 : vector<2x32xf32> to vector<2x32xbf16>
    %cst_45 = arith.constant dense<0.000000e+00> : vector<2x128xf32>
    %264 = tpu.matmul %263, %5, %cst_45 {dimension_numbers = #tpu.dot_dimension_numbers<[1], [0], [0], [1], [0, 0, 1, 1], [], []>} : vector<2x32xbf16>, vector<32x128xbf16>, vector<2x128xf32> -> vector<2x128xf32>
    %265 = arith.truncf %241 : vector<2x32xf32> to vector<2x32xbf16>
    %cst_46 = arith.constant dense<0.000000e+00> : vector<2x128xf32>
    %266 = tpu.matmul %265, %9, %cst_46 {dimension_numbers = #tpu.dot_dimension_numbers<[1], [0], [0], [1], [0, 0, 1, 1], [], []>} : vector<2x32xbf16>, vector<32x128xbf16>, vector<2x128xf32> -> vector<2x128xf32>
    %267 = arith.addf %264, %266 : vector<2x128xf32>
    %268 = vector.broadcast %11 : vector<1x128xf32> to vector<2x128xf32>
    %269 = arith.addf %267, %268 : vector<2x128xf32>
    %270 = vector.extract_strided_slice %269 {offsets = [0, 0], sizes = [2, 96], strides = [1, 1]} : vector<2x128xf32> to vector<2x96xf32>
    %271 = arith.negf %270 : vector<2x96xf32>
    %272 = math.exp %271 : vector<2x96xf32>
    %cst_47 = arith.constant 1.000000e+00 : f32
    %273 = vector.broadcast %cst_47 : f32 to vector<2x96xf32>
    %274 = arith.addf %273, %272 : vector<2x96xf32>
    %275 = arith.divf %273, %274 : vector<2x96xf32>
    %276 = vector.extract_strided_slice %269 {offsets = [0, 96], sizes = [2, 32], strides = [1, 1]} : vector<2x128xf32> to vector<2x32xf32>
    %277 = math.tanh %276 : vector<2x32xf32>
    %278 = vector.extract_strided_slice %275 {offsets = [0, 0], sizes = [2, 32], strides = [1, 1]} : vector<2x96xf32> to vector<2x32xf32>
    %279 = vector.extract_strided_slice %275 {offsets = [0, 32], sizes = [2, 32], strides = [1, 1]} : vector<2x96xf32> to vector<2x32xf32>
    %280 = vector.extract_strided_slice %275 {offsets = [0, 64], sizes = [2, 32], strides = [1, 1]} : vector<2x96xf32> to vector<2x32xf32>
    %281 = arith.mulf %279, %239 : vector<2x32xf32>
    %282 = arith.mulf %278, %277 : vector<2x32xf32>
    %283 = arith.addf %281, %282 : vector<2x32xf32>
    %284 = math.tanh %283 : vector<2x32xf32>
    %285 = arith.mulf %280, %284 : vector<2x32xf32>
    %286 = vector.extract_strided_slice %17 {offsets = [0, 6, 0], sizes = [2, 1, 128], strides = [1, 1, 1]} : vector<2x8x128xf32> to vector<2x1x128xf32>
    %287 = vector.shape_cast %286 : vector<2x1x128xf32> to vector<2x128xf32>
    %288 = arith.truncf %262 : vector<2x32xf32> to vector<2x32xbf16>
    %cst_48 = arith.constant dense<0.000000e+00> : vector<2x128xf32>
    %289 = tpu.matmul %288, %7, %cst_48 {dimension_numbers = #tpu.dot_dimension_numbers<[1], [0], [0], [1], [0, 0, 1, 1], [], []>} : vector<2x32xbf16>, vector<32x128xbf16>, vector<2x128xf32> -> vector<2x128xf32>
    %290 = arith.addf %287, %289 : vector<2x128xf32>
    %291 = vector.extract_strided_slice %290 {offsets = [0, 0], sizes = [2, 96], strides = [1, 1]} : vector<2x128xf32> to vector<2x96xf32>
    %292 = arith.negf %291 : vector<2x96xf32>
    %293 = math.exp %292 : vector<2x96xf32>
    %cst_49 = arith.constant 1.000000e+00 : f32
    %294 = vector.broadcast %cst_49 : f32 to vector<2x96xf32>
    %295 = arith.addf %294, %293 : vector<2x96xf32>
    %296 = arith.divf %294, %295 : vector<2x96xf32>
    %297 = vector.extract_strided_slice %290 {offsets = [0, 96], sizes = [2, 32], strides = [1, 1]} : vector<2x128xf32> to vector<2x32xf32>
    %298 = math.tanh %297 : vector<2x32xf32>
    %299 = vector.extract_strided_slice %296 {offsets = [0, 0], sizes = [2, 32], strides = [1, 1]} : vector<2x96xf32> to vector<2x32xf32>
    %300 = vector.extract_strided_slice %296 {offsets = [0, 32], sizes = [2, 32], strides = [1, 1]} : vector<2x96xf32> to vector<2x32xf32>
    %301 = vector.extract_strided_slice %296 {offsets = [0, 64], sizes = [2, 32], strides = [1, 1]} : vector<2x96xf32> to vector<2x32xf32>
    %302 = arith.mulf %300, %260 : vector<2x32xf32>
    %303 = arith.mulf %299, %298 : vector<2x32xf32>
    %304 = arith.addf %302, %303 : vector<2x32xf32>
    %305 = math.tanh %304 : vector<2x32xf32>
    %306 = arith.mulf %301, %305 : vector<2x32xf32>
    %307 = arith.truncf %306 : vector<2x32xf32> to vector<2x32xbf16>
    %cst_50 = arith.constant dense<0.000000e+00> : vector<2x128xf32>
    %308 = tpu.matmul %307, %5, %cst_50 {dimension_numbers = #tpu.dot_dimension_numbers<[1], [0], [0], [1], [0, 0, 1, 1], [], []>} : vector<2x32xbf16>, vector<32x128xbf16>, vector<2x128xf32> -> vector<2x128xf32>
    %309 = arith.truncf %285 : vector<2x32xf32> to vector<2x32xbf16>
    %cst_51 = arith.constant dense<0.000000e+00> : vector<2x128xf32>
    %310 = tpu.matmul %309, %9, %cst_51 {dimension_numbers = #tpu.dot_dimension_numbers<[1], [0], [0], [1], [0, 0, 1, 1], [], []>} : vector<2x32xbf16>, vector<32x128xbf16>, vector<2x128xf32> -> vector<2x128xf32>
    %311 = arith.addf %308, %310 : vector<2x128xf32>
    %312 = vector.broadcast %11 : vector<1x128xf32> to vector<2x128xf32>
    %313 = arith.addf %311, %312 : vector<2x128xf32>
    %314 = vector.extract_strided_slice %313 {offsets = [0, 0], sizes = [2, 96], strides = [1, 1]} : vector<2x128xf32> to vector<2x96xf32>
    %315 = arith.negf %314 : vector<2x96xf32>
    %316 = math.exp %315 : vector<2x96xf32>
    %cst_52 = arith.constant 1.000000e+00 : f32
    %317 = vector.broadcast %cst_52 : f32 to vector<2x96xf32>
    %318 = arith.addf %317, %316 : vector<2x96xf32>
    %319 = arith.divf %317, %318 : vector<2x96xf32>
    %320 = vector.extract_strided_slice %313 {offsets = [0, 96], sizes = [2, 32], strides = [1, 1]} : vector<2x128xf32> to vector<2x32xf32>
    %321 = math.tanh %320 : vector<2x32xf32>
    %322 = vector.extract_strided_slice %319 {offsets = [0, 0], sizes = [2, 32], strides = [1, 1]} : vector<2x96xf32> to vector<2x32xf32>
    %323 = vector.extract_strided_slice %319 {offsets = [0, 32], sizes = [2, 32], strides = [1, 1]} : vector<2x96xf32> to vector<2x32xf32>
    %324 = vector.extract_strided_slice %319 {offsets = [0, 64], sizes = [2, 32], strides = [1, 1]} : vector<2x96xf32> to vector<2x32xf32>
    %325 = arith.mulf %323, %283 : vector<2x32xf32>
    %326 = arith.mulf %322, %321 : vector<2x32xf32>
    %327 = arith.addf %325, %326 : vector<2x32xf32>
    %328 = math.tanh %327 : vector<2x32xf32>
    %329 = arith.mulf %324, %328 : vector<2x32xf32>
    %330 = vector.extract_strided_slice %17 {offsets = [0, 7, 0], sizes = [2, 1, 128], strides = [1, 1, 1]} : vector<2x8x128xf32> to vector<2x1x128xf32>
    %331 = vector.shape_cast %330 : vector<2x1x128xf32> to vector<2x128xf32>
    %332 = arith.truncf %306 : vector<2x32xf32> to vector<2x32xbf16>
    %cst_53 = arith.constant dense<0.000000e+00> : vector<2x128xf32>
    %333 = tpu.matmul %332, %7, %cst_53 {dimension_numbers = #tpu.dot_dimension_numbers<[1], [0], [0], [1], [0, 0, 1, 1], [], []>} : vector<2x32xbf16>, vector<32x128xbf16>, vector<2x128xf32> -> vector<2x128xf32>
    %334 = arith.addf %331, %333 : vector<2x128xf32>
    %335 = vector.extract_strided_slice %334 {offsets = [0, 0], sizes = [2, 96], strides = [1, 1]} : vector<2x128xf32> to vector<2x96xf32>
    %336 = arith.negf %335 : vector<2x96xf32>
    %337 = math.exp %336 : vector<2x96xf32>
    %cst_54 = arith.constant 1.000000e+00 : f32
    %338 = vector.broadcast %cst_54 : f32 to vector<2x96xf32>
    %339 = arith.addf %338, %337 : vector<2x96xf32>
    %340 = arith.divf %338, %339 : vector<2x96xf32>
    %341 = vector.extract_strided_slice %334 {offsets = [0, 96], sizes = [2, 32], strides = [1, 1]} : vector<2x128xf32> to vector<2x32xf32>
    %342 = math.tanh %341 : vector<2x32xf32>
    %343 = vector.extract_strided_slice %340 {offsets = [0, 0], sizes = [2, 32], strides = [1, 1]} : vector<2x96xf32> to vector<2x32xf32>
    %344 = vector.extract_strided_slice %340 {offsets = [0, 32], sizes = [2, 32], strides = [1, 1]} : vector<2x96xf32> to vector<2x32xf32>
    %345 = vector.extract_strided_slice %340 {offsets = [0, 64], sizes = [2, 32], strides = [1, 1]} : vector<2x96xf32> to vector<2x32xf32>
    %346 = arith.mulf %344, %304 : vector<2x32xf32>
    %347 = arith.mulf %343, %342 : vector<2x32xf32>
    %348 = arith.addf %346, %347 : vector<2x32xf32>
    %349 = math.tanh %348 : vector<2x32xf32>
    %350 = arith.mulf %345, %349 : vector<2x32xf32>
    %351 = arith.truncf %350 : vector<2x32xf32> to vector<2x32xbf16>
    %cst_55 = arith.constant dense<0.000000e+00> : vector<2x128xf32>
    %352 = tpu.matmul %351, %5, %cst_55 {dimension_numbers = #tpu.dot_dimension_numbers<[1], [0], [0], [1], [0, 0, 1, 1], [], []>} : vector<2x32xbf16>, vector<32x128xbf16>, vector<2x128xf32> -> vector<2x128xf32>
    %353 = arith.truncf %329 : vector<2x32xf32> to vector<2x32xbf16>
    %cst_56 = arith.constant dense<0.000000e+00> : vector<2x128xf32>
    %354 = tpu.matmul %353, %9, %cst_56 {dimension_numbers = #tpu.dot_dimension_numbers<[1], [0], [0], [1], [0, 0, 1, 1], [], []>} : vector<2x32xbf16>, vector<32x128xbf16>, vector<2x128xf32> -> vector<2x128xf32>
    %355 = arith.addf %352, %354 : vector<2x128xf32>
    %356 = vector.broadcast %11 : vector<1x128xf32> to vector<2x128xf32>
    %357 = arith.addf %355, %356 : vector<2x128xf32>
    %358 = vector.extract_strided_slice %357 {offsets = [0, 0], sizes = [2, 96], strides = [1, 1]} : vector<2x128xf32> to vector<2x96xf32>
    %359 = arith.negf %358 : vector<2x96xf32>
    %360 = math.exp %359 : vector<2x96xf32>
    %cst_57 = arith.constant 1.000000e+00 : f32
    %361 = vector.broadcast %cst_57 : f32 to vector<2x96xf32>
    %362 = arith.addf %361, %360 : vector<2x96xf32>
    %363 = arith.divf %361, %362 : vector<2x96xf32>
    %364 = vector.extract_strided_slice %357 {offsets = [0, 96], sizes = [2, 32], strides = [1, 1]} : vector<2x128xf32> to vector<2x32xf32>
    %365 = math.tanh %364 : vector<2x32xf32>
    %366 = vector.extract_strided_slice %363 {offsets = [0, 0], sizes = [2, 32], strides = [1, 1]} : vector<2x96xf32> to vector<2x32xf32>
    %367 = vector.extract_strided_slice %363 {offsets = [0, 32], sizes = [2, 32], strides = [1, 1]} : vector<2x96xf32> to vector<2x32xf32>
    %368 = vector.extract_strided_slice %363 {offsets = [0, 64], sizes = [2, 32], strides = [1, 1]} : vector<2x96xf32> to vector<2x32xf32>
    %369 = arith.mulf %367, %327 : vector<2x32xf32>
    %370 = arith.mulf %366, %365 : vector<2x32xf32>
    %371 = arith.addf %369, %370 : vector<2x32xf32>
    %372 = math.tanh %371 : vector<2x32xf32>
    %373 = arith.mulf %368, %372 : vector<2x32xf32>
    %c0_58 = arith.constant 0 : index
    %c0_59 = arith.constant 0 : index
    %374 = vector.load %arg7[%c0_58, %c0_59] : memref<32x10xf32, #tpu.memory_space<vmem>>, vector<32x10xf32>
    %cst_60 = arith.constant dense<0.000000e+00> : vector<2x10xf32>
    %375 = tpu.matmul %373, %374, %cst_60 {dimension_numbers = #tpu.dot_dimension_numbers<[1], [0], [0], [1], [0, 0, 1, 1], [], []>} : vector<2x32xf32>, vector<32x10xf32>, vector<2x10xf32> -> vector<2x10xf32>
    %c0_61 = arith.constant 0 : index
    %c0_62 = arith.constant 0 : index
    %376 = vector.load %arg8[%c0_61, %c0_62] : memref<1x10xf32, #tpu.memory_space<vmem>>, vector<1x10xf32>
    %377 = vector.broadcast %376 : vector<1x10xf32> to vector<2x10xf32>
    %378 = arith.addf %375, %377 : vector<2x10xf32>
    %c0_63 = arith.constant 0 : index
    %c0_64 = arith.constant 0 : index
    %379 = vector.load %arg9[%c0_63, %c0_64] : memref<2x10xf32, #tpu.memory_space<vmem>>, vector<2x10xf32>
    tpu.vector_store %arg9[%c0_63, %c0_64], %378 {strides = array<i32>} : memref<2x10xf32, #tpu.memory_space<vmem>>, vector<2x10xf32>,
    return
  }
}

</mosaic_0001>

<llo_original>
// kernel: lstm_model_forward.1
$region0: #{lstm_model_forward.1}
  #allocation0 [shape = 'u32[]', space=smem, size = 0x4, offset = 0x4, fixed_abs, tag = 'smem constant byte address 0x4 - core index']
  #allocation1 [shape = 'u32[144,128]{1,0:T(1,128)}', space=vmem, size = 0x12000, scoped, tag = 'internal scratch']
  %s0 = inlined_call_operand.hbm [shape: f32[2,8,16], index: 0, kind: input, shape index: {}]
  %s1 = inlined_call_operand.hbm [shape: f32[16,128], index: 1, kind: input, shape index: {}]
  %s2 = inlined_call_operand.vmem [shape: f32[32,128], index: 2, kind: input, shape index: {}]
  %s3 = inlined_call_operand.vmem [shape: f32[1,128], index: 3, kind: input, shape index: {}]
  %s4 = inlined_call_operand.vmem [shape: f32[32,128], index: 4, kind: input, shape index: {}]
  %s5 = inlined_call_operand.hbm [shape: f32[32,128], index: 5, kind: input, shape index: {}]
  %s6 = inlined_call_operand.vmem [shape: f32[1,128], index: 6, kind: input, shape index: {}]
  %s7 = inlined_call_operand.vmem [shape: f32[32,10], index: 7, kind: input, shape index: {}]
  %s8 = inlined_call_operand.hbm [shape: f32[1,10], index: 8, kind: input, shape index: {}]
  %s9 = inlined_call_operand.hbm [shape: f32[2,10], index: 9, kind: output, shape index: {}]
  %s10 = sld [smem:[#allocation0]]
  $region62: #{lstm_model_forward.1} parent=0
    _
  %s12 = ssub.s32 1, %s10
  %s13 = scalar_select 0, %s12, %s10
  $region1: #{lstm_model_forward.1} parent=0
    #allocation2 [shape = 'u8[8192]{0}', space=vmem, size = 0x2000, scoped, tag = 'input window, operand 0, single buffered']
    #allocation3 [shape = 's32[1]{0}', space=sflag, size = 0x4, scoped, tag = 'scoped memory for lstm_model_forward.1']
    #allocation4 [shape = 's32[1]{0}', space=sflag, size = 0x4, scoped, tag = 'scoped memory for lstm_model_forward.1']
    #allocation5 [shape = 'u8[8192]{0}', space=vmem, size = 0x2000, scoped, tag = 'input window, operand 1, single buffered']
    #allocation6 [shape = 's32[1]{0}', space=sflag, size = 0x4, scoped, tag = 'scoped memory for lstm_model_forward.1']
    #allocation7 [shape = 'u8[16384]{0}', space=vmem, size = 0x4000, scoped, tag = 'input window, operand 5, single buffered']
    #allocation8 [shape = 'u8[512]{0}', space=vmem, size = 0x400, scoped, tag = 'input window, operand 8, single buffered']
    #allocation9 [shape = 's32[1]{0}', space=sflag, size = 0x4, scoped, tag = 'scoped memory for lstm_model_forward.1']
    #allocation10 [shape = 'u8[1024]{0}', space=vmem, size = 0x400, scoped, tag = 'output window, operand 0, single buffered']
    %14 = vsyncpa [#allocation3], 0
    %15 = vsyncpa [#allocation6], 0
    %16 = vsyncpa [#allocation9], 0
    %17 = vsyncpa [#allocation4], 0
    // Predicated region
    $region2: #{lstm_model_forward.1} parent=1 // pred_check
      _
    $region3: #{lstm_model_forward.1} parent=1 // pred_check_branch
      %19 = sbr.rel (0) target = $region5
    $region4: #{lstm_model_forward.1} parent=1 // pred_region
      %s21 = ssub.s32 256, 256
      %22 = vsyncadd [#allocation3], %s21
      %s23 = sshll.u32 [#allocation2], 4
      %s24 = int_to_ptr.vmem [resolvable:$true] %s23
      %29 = dma.hbm_to_vmem [thread:$0]  %s0, 256, %s24, [#allocation3], 128, 128, 8
    $region5: #{lstm_model_forward.1} parent=1 // pred_fallthru
      _
    // Predicated region
    $region6: #{lstm_model_forward.1} parent=1 // pred_check
      _
    $region7: #{lstm_model_forward.1} parent=1 // pred_check_branch
      %31 = sbr.rel (0) target = $region9
    $region8: #{lstm_model_forward.1} parent=1 // pred_region
      %s33 = ssub.s32 256, 256
      %34 = vsyncadd [#allocation6], %s33
      %s35 = sshll.u32 [#allocation5], 4
      %s36 = int_to_ptr.vmem [resolvable:$true] %s35
      %41 = dma.hbm_to_vmem [thread:$0]  %s1, 256, %s36, [#allocation6], 128, 128, 8
    $region9: #{lstm_model_forward.1} parent=1 // pred_fallthru
      _
    // Predicated region
    $region10: #{lstm_model_forward.1} parent=1 // pred_check
      _
    $region11: #{lstm_model_forward.1} parent=1 // pred_check_branch
      %43 = sbr.rel (0) target = $region13
    $region12: #{lstm_model_forward.1} parent=1 // pred_region
      _
    $region13: #{lstm_model_forward.1} parent=1 // pred_fallthru
      _
    // Predicated region
    $region14: #{lstm_model_forward.1} parent=1 // pred_check
      _
    $region15: #{lstm_model_forward.1} parent=1 // pred_check_branch
      %45 = sbr.rel (0) target = $region17
    $region16: #{lstm_model_forward.1} parent=1 // pred_region
      _
    $region17: #{lstm_model_forward.1} parent=1 // pred_fallthru
      _
    // Predicated region
    $region18: #{lstm_model_forward.1} parent=1 // pred_check
      _
    $region19: #{lstm_model_forward.1} parent=1 // pred_check_branch
      %47 = sbr.rel (0) target = $region21
    $region20: #{lstm_model_forward.1} parent=1 // pred_region
      _
    $region21: #{lstm_model_forward.1} parent=1 // pred_fallthru
      _
    // Predicated region
    $region22: #{lstm_model_forward.1} parent=1 // pred_check
      _
    $region23: #{lstm_model_forward.1} parent=1 // pred_check_branch
      %49 = sbr.rel (0) target = $region25
    $region24: #{lstm_model_forward.1} parent=1 // pred_region
      %s51 = ssub.s32 512, 512
      %52 = vsyncadd [#allocation6], %s51
      %s53 = sshll.u32 [#allocation7], 4
      %s54 = int_to_ptr.vmem [resolvable:$true] %s53
      %59 = dma.hbm_to_vmem [thread:$0]  %s5, 512, %s54, [#allocation6], 128, 128, 8
    $region25: #{lstm_model_forward.1} parent=1 // pred_fallthru
      _
    // Predicated region
    $region26: #{lstm_model_forward.1} parent=1 // pred_check
      _
    $region27: #{lstm_model_forward.1} parent=1 // pred_check_branch
      %61 = sbr.rel (0) target = $region29
    $region28: #{lstm_model_forward.1} parent=1 // pred_region
      _
    $region29: #{lstm_model_forward.1} parent=1 // pred_fallthru
      _
    // Predicated region
    $region30: #{lstm_model_forward.1} parent=1 // pred_check
      _
    $region31: #{lstm_model_forward.1} parent=1 // pred_check_branch
      %63 = sbr.rel (0) target = $region33
    $region32: #{lstm_model_forward.1} parent=1 // pred_region
      _
    $region33: #{lstm_model_forward.1} parent=1 // pred_fallthru
      _
    // Predicated region
    $region34: #{lstm_model_forward.1} parent=1 // pred_check
      _
    $region35: #{lstm_model_forward.1} parent=1 // pred_check_branch
      %65 = sbr.rel (0) target = $region37
    $region36: #{lstm_model_forward.1} parent=1 // pred_region
      %s67 = ssub.s32 16, 16
      %68 = vsyncadd [#allocation9], %s67
      %s70 = sshll.u32 [#allocation8], 4
      %s71 = int_to_ptr.vmem [resolvable:$true] %s70
      %73 = dma.hbm_to_vmem [thread:$0]  %s8, 16, %s71, [#allocation9]
    $region37: #{lstm_model_forward.1} parent=1 // pred_fallthru
      _
    // Predicated region
    $region38: #{lstm_model_forward.1} parent=1 // pred_check
      _
    $region39: #{lstm_model_forward.1} parent=1 // pred_check_branch
      %75 = sbr.rel (0) target = $region41
    $region40: #{lstm_model_forward.1} parent=1 // pred_region
      %76 = dma.done [#allocation3], 256
    $region41: #{lstm_model_forward.1} parent=1 // pred_fallthru
      _
    // Predicated region
    $region42: #{lstm_model_forward.1} parent=1 // pred_check
      _
    $region43: #{lstm_model_forward.1} parent=1 // pred_check_branch
      %78 = sbr.rel (0) target = $region45
    $region44: #{lstm_model_forward.1} parent=1 // pred_region
      %79 = dma.done [#allocation6], 256
    $region45: #{lstm_model_forward.1} parent=1 // pred_fallthru
      _
    // Predicated region
    $region46: #{lstm_model_forward.1} parent=1 // pred_check
      _
    $region47: #{lstm_model_forward.1} parent=1 // pred_check_branch
      %81 = sbr.rel (0) target = $region49
    $region48: #{lstm_model_forward.1} parent=1 // pred_region
      %82 = dma.done [#allocation6], 512
    $region49: #{lstm_model_forward.1} parent=1 // pred_fallthru
      _
    // Predicated region
    $region50: #{lstm_model_forward.1} parent=1 // pred_check
      _
    $region51: #{lstm_model_forward.1} parent=1 // pred_check_branch
      %84 = sbr.rel (0) target = $region53
    $region52: #{lstm_model_forward.1} parent=1 // pred_region
      %85 = dma.done [#allocation9], 16
    $region53: #{lstm_model_forward.1} parent=1 // pred_fallthru
      _
    %v87 = vld [vmem:[#allocation2] sm:$0xff]
    %v88 = vld [vmem:[#allocation2 + $0x8] sm:$0xff]
    %v89 = vpack.c.bf16 %v87, %v87
    %v90 = vpack.c.bf16 %v88, %v88
    %v91 = vld [vmem:[#allocation5] sm:$0xff]
    %v92 = vld [vmem:[#allocation5 + $0x8] sm:$0xff]
    %v93 = vpack.c.bf16 %v92, %v91
    %v94 = vld [vmem:[%s4] sm:$0xff]
    %v95 = vld [vmem:[%s4 + $0x8] sm:$0xff]
    %v96 = vld [vmem:[%s4 + $0x10] sm:$0xff]
    %v97 = vld [vmem:[%s4 + $0x18] sm:$0xff]
    %v98 = vpack.c.bf16 %v95, %v94
    %v99 = vpack.c.bf16 %v97, %v96
    %v100 = vld [vmem:[%s2] sm:$0xff]
    %v101 = vld [vmem:[%s2 + $0x8] sm:$0xff]
    %v102 = vld [vmem:[%s2 + $0x10] sm:$0xff]
    %v103 = vld [vmem:[%s2 + $0x18] sm:$0xff]
    %v104 = vpack.c.bf16 %v101, %v100
    %v105 = vpack.c.bf16 %v103, %v102
    %v106 = vld [vmem:[#allocation7] sm:$0xff]
    %v107 = vld [vmem:[#allocation7 + $0x8] sm:$0xff]
    %v108 = vld [vmem:[#allocation7 + $0x10] sm:$0xff]
    %v109 = vld [vmem:[#allocation7 + $0x18] sm:$0xff]
    %v110 = vpack.c.bf16 %v107, %v106
    %v111 = vpack.c.bf16 %v109, %v108
    %v112 = vld [vmem:[%s3] sm:$0x1]
    %v113 = vld [vmem:[%s6] sm:$0x1]
    %v116 = vunpack.c.l.b16 %v89
    %v117 = vunpack.c.l.b16 %v90
    %v118 = vpack.c.b16 %v117, %v116
    %vm119 = vcmask 130048
    %v121 = vsel %vm119, %v118, 0
    %123 = vmatprep.subr.bf16.mxu0 0
    %124 = vmatpush1.bf16.msra.mxu0 %v93
    %125 = vmatprep.subr.bf16.mxu0 0
    %126 = vmatpush1.bf16.msra.mxu0 0
    %127 = vmatprep.subr.bf16.mxu0 0
    %128 = vmatpush1.bf16.msra.mxu0 0
    %129 = vmatprep.subr.bf16.mxu0 0
    %130 = vmatpush1.bf16.msra.mxu0 0
    %131 = vmatprep.subr.bf16.mxu0 0
    %132 = vmatpush1.bf16.msra.mxu0 0
    %133 = vmatprep.subr.bf16.mxu0 0
    %134 = vmatpush1.bf16.msra.mxu0 0
    %135 = vmatprep.subr.bf16.mxu0 0
    %136 = vmatpush1.bf16.msra.mxu0 0
    %137 = vmatprep.subr.bf16.mxu0 0
    %138 = vmatpush1.bf16.msra.mxu0 0
    %139 = vmatprep.subr.bf16.mxu0 0
    %140 = vmatpush1.bf16.msra.mxu0 0
    %141 = vmatprep.subr.bf16.mxu0 0
    %142 = vmatpush1.bf16.msra.mxu0 0
    %143 = vmatprep.subr.bf16.mxu0 0
    %144 = vmatpush1.bf16.msra.mxu0 0
    %145 = vmatprep.subr.bf16.mxu0 0
    %146 = vmatpush1.bf16.msra.mxu0 0
    %147 = vmatprep.subr.bf16.mxu0 0
    %148 = vmatpush1.bf16.msra.mxu0 0
    %149 = vmatprep.subr.bf16.mxu0 0
    %150 = vmatpush1.bf16.msra.mxu0 0
    %151 = vmatprep.subr.bf16.mxu0 0
    %152 = vmatpush1.bf16.msra.mxu0 0
    %153 = vmatprep.subr.bf16.mxu0 0
    %154 = vmatpush1.bf16.msra.mxu0 0
    %155 = vmatprep.mubr.bf16.mxu0 0
    %156 = vmatmul.mubr.bf16.gmra.mrb[0].mxu0 %v121
    %v157 = vpop.f32.mrb[0].mxu0
    %v158 = vadd.f32 0.0, %v157
    %v159 = vpop.f32.mrb[0].mxu0
    %v160 = vpop.f32.mrb[0].mxu0
    %v161 = vadd.f32 0.0, %v160
    %v162 = vpop.f32.mrb[0].mxu0
    %163 = vdwg.mxu0
    %v165 = vlaneseq
    %v166 = vshrl.u32 %v165, 7
    %v167 = vsub.s32 0, %v166
    %v168 = vrot.slane %v112, %v167
    %v170 = vadd.f32 %v158, %v168
    %v171 = vadd.f32 %v161, %v168
    %vm172 = vcmask 261120
    %v174 = vsel %vm172, 0, 0
    %176 = vmatprep.subr.bf16.mxu0 0
    %177 = vmatpush1.bf16.msra.mxu0 %v104
    %178 = vmatprep.subr.bf16.mxu0 0
    %179 = vmatpush1.bf16.msra.mxu0 %v105
    %180 = vmatprep.subr.bf16.mxu0 0
    %181 = vmatpush1.bf16.msra.mxu0 0
    %182 = vmatprep.subr.bf16.mxu0 0
    %183 = vmatpush1.bf16.msra.mxu0 0
    %184 = vmatprep.subr.bf16.mxu0 0
    %185 = vmatpush1.bf16.msra.mxu0 0
    %186 = vmatprep.subr.bf16.mxu0 0
    %187 = vmatpush1.bf16.msra.mxu0 0
    %188 = vmatprep.subr.bf16.mxu0 0
    %189 = vmatpush1.bf16.msra.mxu0 0
    %190 = vmatprep.subr.bf16.mxu0 0
    %191 = vmatpush1.bf16.msra.mxu0 0
    %192 = vmatprep.subr.bf16.mxu0 0
    %193 = vmatpush1.bf16.msra.mxu0 0
    %194 = vmatprep.subr.bf16.mxu0 0
    %195 = vmatpush1.bf16.msra.mxu0 0
    %196 = vmatprep.subr.bf16.mxu0 0
    %197 = vmatpush1.bf16.msra.mxu0 0
    %198 = vmatprep.subr.bf16.mxu0 0
    %199 = vmatpush1.bf16.msra.mxu0 0
    %200 = vmatprep.subr.bf16.mxu0 0
    %201 = vmatpush1.bf16.msra.mxu0 0
    %202 = vmatprep.subr.bf16.mxu0 0
    %203 = vmatpush1.bf16.msra.mxu0 0
    %204 = vmatprep.subr.bf16.mxu0 0
    %205 = vmatpush1.bf16.msra.mxu0 0
    %206 = vmatprep.subr.bf16.mxu0 0
    %207 = vmatpush1.bf16.msra.mxu0 0
    %208 = vmatprep.mubr.bf16.mxu0 0
    %209 = vmatmul.mubr.bf16.gmra.mrb[0].mxu0 %v174
    %v210 = vpop.f32.mrb[0].mxu0
    %v211 = vadd.f32 0.0, %v210
    %v212 = vpop.f32.mrb[0].mxu0
    %v213 = vpop.f32.mrb[0].mxu0
    %v214 = vpop.f32.mrb[0].mxu0
    %215 = vdwg.mxu0
    %v217 = vrot.slane %v211, 1
    %v220 = vadd.f32 %v170, %v211
    %v221 = vadd.f32 %v171, %v217
    %v222 = vxor.u32 %v220, 2147483648
    %v223 = vxor.u32 %v221, 2147483648
    %v224 = vmul.f32 %v222, 1.442695
    %v225 = vpow.pop %v224
    %v226 = vmul.f32 %v223, 1.442695
    %v227 = vpow.pop %v226
    %v228 = vadd.f32 %v225, 1.0
    %v229 = vadd.f32 %v227, 1.0
    %v230 = vrcp.pop %v228
    %v231 = vmul.f32 1.0, %v230
    %v232 = vrcp.pop %v229
    %v233 = vmul.f32 1.0, %v232
    %v234 = vtanh.pop %v220
    %v235 = vtanh.pop %v221
    %v236 = vmul.f32 %v231, 0.0
    %v237 = vmul.f32 %v233, 0.0
    %240 = vrot.lane.b32.xlu0 %v234, 32
    %v241 = vpop.permute.xlu0 %240
    %242 = vrot.lane.b32.xlu0 %v235, 32
    %v243 = vpop.permute.xlu0 %242
    %v246 = vmul.f32 %v231, %v241
    %v247 = vmul.f32 %v233, %v243
    %250 = vrot.lane.b32.xlu0 %v246, 32
    %v251 = vpop.permute.xlu0 %250
    %252 = vrot.lane.b32.xlu0 %v247, 32
    %v253 = vpop.permute.xlu0 %252
    %v256 = vadd.f32 %v236, %v251
    %v257 = vadd.f32 %v237, %v253
    %v258 = vtanh.pop %v256
    %v259 = vtanh.pop %v257
    %262 = vrot.lane.b32.xlu0 %v258, 32
    %v263 = vpop.permute.xlu0 %262
    %264 = vrot.lane.b32.xlu0 %v259, 32
    %v265 = vpop.permute.xlu0 %264
    %v268 = vmul.f32 %v231, %v263
    %v269 = vmul.f32 %v233, %v265
    %v270 = vpack.c.bf16 %v268, %v268
    %v271 = vpack.c.bf16 %v269, %v269
    %272 = vmatprep.subr.bf16.mxu0 0
    %273 = vmatpush1.bf16.msra.mxu0 %v110
    %274 = vmatprep.subr.bf16.mxu0 0
    %275 = vmatpush1.bf16.msra.mxu0 %v111
    %276 = vmatprep.subr.bf16.mxu0 0
    %277 = vmatpush1.bf16.msra.mxu0 0
    %278 = vmatprep.subr.bf16.mxu0 0
    %279 = vmatpush1.bf16.msra.mxu0 0
    %280 = vmatprep.subr.bf16.mxu0 0
    %281 = vmatpush1.bf16.msra.mxu0 0
    %282 = vmatprep.subr.bf16.mxu0 0
    %283 = vmatpush1.bf16.msra.mxu0 0
    %284 = vmatprep.subr.bf16.mxu0 0
    %285 = vmatpush1.bf16.msra.mxu0 0
    %286 = vmatprep.subr.bf16.mxu0 0
    %287 = vmatpush1.bf16.msra.mxu0 0
    %288 = vmatprep.subr.bf16.mxu0 0
    %289 = vmatpush1.bf16.msra.mxu0 0
    %290 = vmatprep.subr.bf16.mxu0 0
    %291 = vmatpush1.bf16.msra.mxu0 0
    %292 = vmatprep.subr.bf16.mxu0 0
    %293 = vmatpush1.bf16.msra.mxu0 0
    %294 = vmatprep.subr.bf16.mxu0 0
    %295 = vmatpush1.bf16.msra.mxu0 0
    %296 = vmatprep.subr.bf16.mxu0 0
    %297 = vmatpush1.bf16.msra.mxu0 0
    %298 = vmatprep.subr.bf16.mxu0 0
    %299 = vmatpush1.bf16.msra.mxu0 0
    %300 = vmatprep.subr.bf16.mxu0 0
    %301 = vmatpush1.bf16.msra.mxu0 0
    %302 = vmatprep.subr.bf16.mxu0 0
    %303 = vmatpush1.bf16.msra.mxu0 0
    %304 = vmatprep.mubr.bf16.mxu0 0
    %305 = vmatmul.mubr.bf16.gmra.mrb[0].mxu0 %v174
    %v306 = vpop.f32.mrb[0].mxu0
    %v307 = vadd.f32 0.0, %v306
    %v308 = vpop.f32.mrb[0].mxu0
    %v309 = vpop.f32.mrb[0].mxu0
    %v310 = vpop.f32.mrb[0].mxu0
    %311 = vdwg.mxu0
    %v314 = vunpack.c.l.b16 %v270
    %v315 = vunpack.c.l.b16 %v271
    %v316 = vrot.slane %v315, 7
    %vm317 = vcmask 1041409
    %v318 = vsel %vm317, %v316, %v314
    %v319 = vpack.c.b16 %v318, %v318
    %320 = vrot.lane.b32.xlu0 %v319, 64
    %v321 = vpop.permute.xlu0 %320
    %v323 = vsel %vm172, %v321, 0
    %325 = vmatprep.subr.bf16.mxu0 0
    %326 = vmatpush1.bf16.msra.mxu0 %v98
    %327 = vmatprep.subr.bf16.mxu0 0
    %328 = vmatpush1.bf16.msra.mxu0 %v99
    %329 = vmatprep.subr.bf16.mxu0 0
    %330 = vmatpush1.bf16.msra.mxu0 0
    %331 = vmatprep.subr.bf16.mxu0 0
    %332 = vmatpush1.bf16.msra.mxu0 0
    %333 = vmatprep.subr.bf16.mxu0 0
    %334 = vmatpush1.bf16.msra.mxu0 0
    %335 = vmatprep.subr.bf16.mxu0 0
    %336 = vmatpush1.bf16.msra.mxu0 0
    %337 = vmatprep.subr.bf16.mxu0 0
    %338 = vmatpush1.bf16.msra.mxu0 0
    %339 = vmatprep.subr.bf16.mxu0 0
    %340 = vmatpush1.bf16.msra.mxu0 0
    %341 = vmatprep.subr.bf16.mxu0 0
    %342 = vmatpush1.bf16.msra.mxu0 0
    %343 = vmatprep.subr.bf16.mxu0 0
    %344 = vmatpush1.bf16.msra.mxu0 0
    %345 = vmatprep.subr.bf16.mxu0 0
    %346 = vmatpush1.bf16.msra.mxu0 0
    %347 = vmatprep.subr.bf16.mxu0 0
    %348 = vmatpush1.bf16.msra.mxu0 0
    %349 = vmatprep.subr.bf16.mxu0 0
    %350 = vmatpush1.bf16.msra.mxu0 0
    %351 = vmatprep.subr.bf16.mxu0 0
    %352 = vmatpush1.bf16.msra.mxu0 0
    %353 = vmatprep.subr.bf16.mxu0 0
    %354 = vmatpush1.bf16.msra.mxu0 0
    %355 = vmatprep.subr.bf16.mxu0 0
    %356 = vmatpush1.bf16.msra.mxu0 0
    %357 = vmatprep.mubr.bf16.mxu0 0
    %358 = vmatmul.mubr.bf16.gmra.mrb[0].mxu0 %v323
    %v359 = vpop.f32.mrb[0].mxu0
    %v360 = vadd.f32 %v307, %v359
    %v361 = vpop.f32.mrb[0].mxu0
    %v362 = vpop.f32.mrb[0].mxu0
    %v363 = vpop.f32.mrb[0].mxu0
    %364 = vdwg.mxu0
    %v366 = vlaneseq
    %v367 = vshrl.u32 %v366, 7
    %v368 = vsub.s32 0, %v367
    %v369 = vrot.slane %v113, %v368
    %v371 = vadd.f32 %v360, %v369
    %v372 = vxor.u32 %v371, 2147483648
    %v373 = vmul.f32 %v372, 1.442695
    %v374 = vpow.pop %v373
    %v375 = vadd.f32 %v374, 1.0
    %v376 = vrcp.pop %v375
    %v377 = vmul.f32 1.0, %v376
    %v378 = vtanh.pop %v371
    %v379 = vmul.f32 %v377, 0.0
    %381 = vrot.lane.b32.xlu0 %v378, 32
    %v382 = vpop.permute.xlu0 %381
    %v384 = vmul.f32 %v377, %v382
    %386 = vrot.lane.b32.xlu0 %v384, 32
    %v387 = vpop.permute.xlu0 %386
    %v389 = vadd.f32 %v379, %v387
    %v390 = vtanh.pop %v389
    %392 = vrot.lane.b32.xlu0 %v390, 32
    %v393 = vpop.permute.xlu0 %392
    %v395 = vmul.f32 %v377, %v393
    %396 = vmatprep.subr.bf16.mxu0 0
    %397 = vmatpush1.bf16.msra.mxu0 %v104
    %398 = vmatprep.subr.bf16.mxu0 0
    %399 = vmatpush1.bf16.msra.mxu0 %v105
    %400 = vmatprep.subr.bf16.mxu0 0
    %401 = vmatpush1.bf16.msra.mxu0 0
    %402 = vmatprep.subr.bf16.mxu0 0
    %403 = vmatpush1.bf16.msra.mxu0 0
    %404 = vmatprep.subr.bf16.mxu0 0
    %405 = vmatpush1.bf16.msra.mxu0 0
    %406 = vmatprep.subr.bf16.mxu0 0
    %407 = vmatpush1.bf16.msra.mxu0 0
    %408 = vmatprep.subr.bf16.mxu0 0
    %409 = vmatpush1.bf16.msra.mxu0 0
    %410 = vmatprep.subr.bf16.mxu0 0
    %411 = vmatpush1.bf16.msra.mxu0 0
    %412 = vmatprep.subr.bf16.mxu0 0
    %413 = vmatpush1.bf16.msra.mxu0 0
    %414 = vmatprep.subr.bf16.mxu0 0
    %415 = vmatpush1.bf16.msra.mxu0 0
    %416 = vmatprep.subr.bf16.mxu0 0
    %417 = vmatpush1.bf16.msra.mxu0 0
    %418 = vmatprep.subr.bf16.mxu0 0
    %419 = vmatpush1.bf16.msra.mxu0 0
    %420 = vmatprep.subr.bf16.mxu0 0
    %421 = vmatpush1.bf16.msra.mxu0 0
    %422 = vmatprep.subr.bf16.mxu0 0
    %423 = vmatpush1.bf16.msra.mxu0 0
    %424 = vmatprep.subr.bf16.mxu0 0
    %425 = vmatpush1.bf16.msra.mxu0 0
    %426 = vmatprep.subr.bf16.mxu0 0
    %427 = vmatpush1.bf16.msra.mxu0 0
    %428 = vmatprep.mubr.bf16.mxu0 0
    %429 = vmatmul.mubr.bf16.gmra.mrb[0].mxu0 %v323
    %v430 = vpop.f32.mrb[0].mxu0
    %v431 = vadd.f32 0.0, %v430
    %v432 = vpop.f32.mrb[0].mxu0
    %v433 = vpop.f32.mrb[0].mxu0
    %v434 = vpop.f32.mrb[0].mxu0
    %435 = vdwg.mxu0
    %v437 = vrot.slane %v431, 7
    %v440 = vadd.f32 %v170, %v437
    %v441 = vadd.f32 %v171, %v431
    %v442 = vxor.u32 %v440, 2147483648
    %v443 = vxor.u32 %v441, 2147483648
    %v444 = vmul.f32 %v442, 1.442695
    %v445 = vpow.pop %v444
    %v446 = vmul.f32 %v443, 1.442695
    %v447 = vpow.pop %v446
    %v448 = vadd.f32 %v445, 1.0
    %v449 = vadd.f32 %v447, 1.0
    %v450 = vrcp.pop %v448
    %v451 = vmul.f32 1.0, %v450
    %v452 = vrcp.pop %v449
    %v453 = vmul.f32 1.0, %v452
    %v454 = vtanh.pop %v440
    %v455 = vtanh.pop %v441
    %v458 = vrot.slane %v256, 7
    %v459 = vrot.slane %v257, 7
    %v462 = vmul.f32 %v451, %v458
    %v463 = vmul.f32 %v453, %v459
    %466 = vrot.lane.b32.xlu0 %v454, 32
    %v467 = vpop.permute.xlu0 %466
    %468 = vrot.lane.b32.xlu0 %v455, 32
    %v469 = vpop.permute.xlu0 %468
    %v472 = vmul.f32 %v451, %v467
    %v473 = vmul.f32 %v453, %v469
    %476 = vrot.lane.b32.xlu0 %v472, 32
    %v477 = vpop.permute.xlu0 %476
    %478 = vrot.lane.b32.xlu0 %v473, 32
    %v479 = vpop.permute.xlu0 %478
    %v482 = vadd.f32 %v462, %v477
    %v483 = vadd.f32 %v463, %v479
    %v484 = vtanh.pop %v482
    %v485 = vtanh.pop %v483
    %488 = vrot.lane.b32.xlu0 %v484, 32
    %v489 = vpop.permute.xlu0 %488
    %490 = vrot.lane.b32.xlu0 %v485, 32
    %v491 = vpop.permute.xlu0 %490
    %v494 = vmul.f32 %v451, %v489
    %v495 = vmul.f32 %v453, %v491
    %v496 = vpack.c.bf16 %v494, %v494
    %v497 = vpack.c.bf16 %v495, %v495
    %v498 = vpack.c.bf16 %v395, %v395
    %500 = vrot.lane.b32.xlu0 %v498, 64
    %v501 = vpop.permute.xlu0 %500
    %v503 = vsel %vm172, %v501, 0
    %505 = vmatprep.subr.bf16.mxu0 0
    %506 = vmatpush1.bf16.msra.mxu0 %v110
    %507 = vmatprep.subr.bf16.mxu0 0
    %508 = vmatpush1.bf16.msra.mxu0 %v111
    %509 = vmatprep.subr.bf16.mxu0 0
    %510 = vmatpush1.bf16.msra.mxu0 0
    %511 = vmatprep.subr.bf16.mxu0 0
    %512 = vmatpush1.bf16.msra.mxu0 0
    %513 = vmatprep.subr.bf16.mxu0 0
    %514 = vmatpush1.bf16.msra.mxu0 0
    %515 = vmatprep.subr.bf16.mxu0 0
    %516 = vmatpush1.bf16.msra.mxu0 0
    %517 = vmatprep.subr.bf16.mxu0 0
    %518 = vmatpush1.bf16.msra.mxu0 0
    %519 = vmatprep.subr.bf16.mxu0 0
    %520 = vmatpush1.bf16.msra.mxu0 0
    %521 = vmatprep.subr.bf16.mxu0 0
    %522 = vmatpush1.bf16.msra.mxu0 0
    %523 = vmatprep.subr.bf16.mxu0 0
    %524 = vmatpush1.bf16.msra.mxu0 0
    %525 = vmatprep.subr.bf16.mxu0 0
    %526 = vmatpush1.bf16.msra.mxu0 0
    %527 = vmatprep.subr.bf16.mxu0 0
    %528 = vmatpush1.bf16.msra.mxu0 0
    %529 = vmatprep.subr.bf16.mxu0 0
    %530 = vmatpush1.bf16.msra.mxu0 0
    %531 = vmatprep.subr.bf16.mxu0 0
    %532 = vmatpush1.bf16.msra.mxu0 0
    %533 = vmatprep.subr.bf16.mxu0 0
    %534 = vmatpush1.bf16.msra.mxu0 0
    %535 = vmatprep.subr.bf16.mxu0 0
    %536 = vmatpush1.bf16.msra.mxu0 0
    %537 = vmatprep.mubr.bf16.mxu0 0
    %538 = vmatmul.mubr.bf16.gmra.mrb[0].mxu0 %v503
    %v539 = vpop.f32.mrb[0].mxu0
    %v540 = vadd.f32 0.0, %v539
    %v541 = vpop.f32.mrb[0].mxu0
    %v542 = vpop.f32.mrb[0].mxu0
    %v543 = vpop.f32.mrb[0].mxu0
    %544 = vdwg.mxu0
    %v547 = vunpack.c.l.b16 %v496
    %v548 = vunpack.c.l.b16 %v497
    %v549 = vrot.slane %v547, 1
    %v550 = vsel %vm317, %v548, %v549
    %v551 = vpack.c.b16 %v550, %v550
    %552 = vrot.lane.b32.xlu0 %v551, 64
    %v553 = vpop.permute.xlu0 %552
    %v555 = vsel %vm172, %v553, 0
    %557 = vmatprep.subr.bf16.mxu0 0
    %558 = vmatpush1.bf16.msra.mxu0 %v98
    %559 = vmatprep.subr.bf16.mxu0 0
    %560 = vmatpush1.bf16.msra.mxu0 %v99
    %561 = vmatprep.subr.bf16.mxu0 0
    %562 = vmatpush1.bf16.msra.mxu0 0
    %563 = vmatprep.subr.bf16.mxu0 0
    %564 = vmatpush1.bf16.msra.mxu0 0
    %565 = vmatprep.subr.bf16.mxu0 0
    %566 = vmatpush1.bf16.msra.mxu0 0
    %567 = vmatprep.subr.bf16.mxu0 0
    %568 = vmatpush1.bf16.msra.mxu0 0
    %569 = vmatprep.subr.bf16.mxu0 0
    %570 = vmatpush1.bf16.msra.mxu0 0
    %571 = vmatprep.subr.bf16.mxu0 0
    %572 = vmatpush1.bf16.msra.mxu0 0
    %573 = vmatprep.subr.bf16.mxu0 0
    %574 = vmatpush1.bf16.msra.mxu0 0
    %575 = vmatprep.subr.bf16.mxu0 0
    %576 = vmatpush1.bf16.msra.mxu0 0
    %577 = vmatprep.subr.bf16.mxu0 0
    %578 = vmatpush1.bf16.msra.mxu0 0
    %579 = vmatprep.subr.bf16.mxu0 0
    %580 = vmatpush1.bf16.msra.mxu0 0
    %581 = vmatprep.subr.bf16.mxu0 0
    %582 = vmatpush1.bf16.msra.mxu0 0
    %583 = vmatprep.subr.bf16.mxu0 0
    %584 = vmatpush1.bf16.msra.mxu0 0
    %585 = vmatprep.subr.bf16.mxu0 0
    %586 = vmatpush1.bf16.msra.mxu0 0
    %587 = vmatprep.subr.bf16.mxu0 0
    %588 = vmatpush1.bf16.msra.mxu0 0
    %589 = vmatprep.mubr.bf16.mxu0 0
    %590 = vmatmul.mubr.bf16.gmra.mrb[0].mxu0 %v555
    %v591 = vpop.f32.mrb[0].mxu0
    %v592 = vadd.f32 %v540, %v591
    %v593 = vpop.f32.mrb[0].mxu0
    %v594 = vpop.f32.mrb[0].mxu0
    %v595 = vpop.f32.mrb[0].mxu0
    %596 = vdwg.mxu0
    %v597 = vadd.f32 %v592, %v369
    %v598 = vxor.u32 %v597, 2147483648
    %v599 = vmul.f32 %v598, 1.442695
    %v600 = vpow.pop %v599
    %v601 = vadd.f32 %v600, 1.0
    %v602 = vrcp.pop %v601
    %v603 = vmul.f32 1.0, %v602
    %v604 = vtanh.pop %v597
    %v605 = vmul.f32 %v603, %v389
    %607 = vrot.lane.b32.xlu0 %v604, 32
    %v608 = vpop.permute.xlu0 %607
    %v610 = vmul.f32 %v603, %v608
    %612 = vrot.lane.b32.xlu0 %v610, 32
    %v613 = vpop.permute.xlu0 %612
    %v615 = vadd.f32 %v605, %v613
    %v616 = vtanh.pop %v615
    %618 = vrot.lane.b32.xlu0 %v616, 32
    %v619 = vpop.permute.xlu0 %618
    %v621 = vmul.f32 %v603, %v619
    %622 = vmatprep.subr.bf16.mxu0 0
    %623 = vmatpush1.bf16.msra.mxu0 %v104
    %624 = vmatprep.subr.bf16.mxu0 0
    %625 = vmatpush1.bf16.msra.mxu0 %v105
    %626 = vmatprep.subr.bf16.mxu0 0
    %627 = vmatpush1.bf16.msra.mxu0 0
    %628 = vmatprep.subr.bf16.mxu0 0
    %629 = vmatpush1.bf16.msra.mxu0 0
    %630 = vmatprep.subr.bf16.mxu0 0
    %631 = vmatpush1.bf16.msra.mxu0 0
    %632 = vmatprep.subr.bf16.mxu0 0
    %633 = vmatpush1.bf16.msra.mxu0 0
    %634 = vmatprep.subr.bf16.mxu0 0
    %635 = vmatpush1.bf16.msra.mxu0 0
    %636 = vmatprep.subr.bf16.mxu0 0
    %637 = vmatpush1.bf16.msra.mxu0 0
    %638 = vmatprep.subr.bf16.mxu0 0
    %639 = vmatpush1.bf16.msra.mxu0 0
    %640 = vmatprep.subr.bf16.mxu0 0
    %641 = vmatpush1.bf16.msra.mxu0 0
    %642 = vmatprep.subr.bf16.mxu0 0
    %643 = vmatpush1.bf16.msra.mxu0 0
    %644 = vmatprep.subr.bf16.mxu0 0
    %645 = vmatpush1.bf16.msra.mxu0 0
    %646 = vmatprep.subr.bf16.mxu0 0
    %647 = vmatpush1.bf16.msra.mxu0 0
    %648 = vmatprep.subr.bf16.mxu0 0
    %649 = vmatpush1.bf16.msra.mxu0 0
    %650 = vmatprep.subr.bf16.mxu0 0
    %651 = vmatpush1.bf16.msra.mxu0 0
    %652 = vmatprep.subr.bf16.mxu0 0
    %653 = vmatpush1.bf16.msra.mxu0 0
    %654 = vmatprep.mubr.bf16.mxu0 0
    %655 = vmatmul.mubr.bf16.gmra.mrb[0].mxu0 %v555
    %v656 = vpop.f32.mrb[0].mxu0
    %v657 = vadd.f32 0.0, %v656
    %v658 = vpop.f32.mrb[0].mxu0
    %v659 = vpop.f32.mrb[0].mxu0
    %v660 = vpop.f32.mrb[0].mxu0
    %661 = vdwg.mxu0
    %v663 = vrot.slane %v657, 6
    %v664 = vrot.slane %v657, 7
    %v667 = vadd.f32 %v170, %v663
    %v668 = vadd.f32 %v171, %v664
    %v669 = vxor.u32 %v667, 2147483648
    %v670 = vxor.u32 %v668, 2147483648
    %v671 = vmul.f32 %v669, 1.442695
    %v672 = vpow.pop %v671
    %v673 = vmul.f32 %v670, 1.442695
    %v674 = vpow.pop %v673
    %v675 = vadd.f32 %v672, 1.0
    %v676 = vadd.f32 %v674, 1.0
    %v677 = vrcp.pop %v675
    %v678 = vmul.f32 1.0, %v677
    %v679 = vrcp.pop %v676
    %v680 = vmul.f32 1.0, %v679
    %v681 = vtanh.pop %v667
    %v682 = vtanh.pop %v668
    %v685 = vrot.slane %v482, 7
    %v686 = vrot.slane %v483, 7
    %v689 = vmul.f32 %v678, %v685
    %v690 = vmul.f32 %v680, %v686
    %693 = vrot.lane.b32.xlu0 %v681, 32
    %v694 = vpop.permute.xlu0 %693
    %695 = vrot.lane.b32.xlu0 %v682, 32
    %v696 = vpop.permute.xlu0 %695
    %v699 = vmul.f32 %v678, %v694
    %v700 = vmul.f32 %v680, %v696
    %703 = vrot.lane.b32.xlu0 %v699, 32
    %v704 = vpop.permute.xlu0 %703
    %705 = vrot.lane.b32.xlu0 %v700, 32
    %v706 = vpop.permute.xlu0 %705
    %v709 = vadd.f32 %v689, %v704
    %v710 = vadd.f32 %v690, %v706
    %v711 = vtanh.pop %v709
    %v712 = vtanh.pop %v710
    %715 = vrot.lane.b32.xlu0 %v711, 32
    %v716 = vpop.permute.xlu0 %715
    %717 = vrot.lane.b32.xlu0 %v712, 32
    %v718 = vpop.permute.xlu0 %717
    %v721 = vmul.f32 %v678, %v716
    %v722 = vmul.f32 %v680, %v718
    %v723 = vpack.c.bf16 %v721, %v721
    %v724 = vpack.c.bf16 %v722, %v722
    %v725 = vpack.c.bf16 %v621, %v621
    %727 = vrot.lane.b32.xlu0 %v725, 64
    %v728 = vpop.permute.xlu0 %727
    %v730 = vsel %vm172, %v728, 0
    %732 = vmatprep.subr.bf16.mxu0 0
    %733 = vmatpush1.bf16.msra.mxu0 %v110
    %734 = vmatprep.subr.bf16.mxu0 0
    %735 = vmatpush1.bf16.msra.mxu0 %v111
    %736 = vmatprep.subr.bf16.mxu0 0
    %737 = vmatpush1.bf16.msra.mxu0 0
    %738 = vmatprep.subr.bf16.mxu0 0
    %739 = vmatpush1.bf16.msra.mxu0 0
    %740 = vmatprep.subr.bf16.mxu0 0
    %741 = vmatpush1.bf16.msra.mxu0 0
    %742 = vmatprep.subr.bf16.mxu0 0
    %743 = vmatpush1.bf16.msra.mxu0 0
    %744 = vmatprep.subr.bf16.mxu0 0
    %745 = vmatpush1.bf16.msra.mxu0 0
    %746 = vmatprep.subr.bf16.mxu0 0
    %747 = vmatpush1.bf16.msra.mxu0 0
    %748 = vmatprep.subr.bf16.mxu0 0
    %749 = vmatpush1.bf16.msra.mxu0 0
    %750 = vmatprep.subr.bf16.mxu0 0
    %751 = vmatpush1.bf16.msra.mxu0 0
    %752 = vmatprep.subr.bf16.mxu0 0
    %753 = vmatpush1.bf16.msra.mxu0 0
    %754 = vmatprep.subr.bf16.mxu0 0
    %755 = vmatpush1.bf16.msra.mxu0 0
    %756 = vmatprep.subr.bf16.mxu0 0
    %757 = vmatpush1.bf16.msra.mxu0 0
    %758 = vmatprep.subr.bf16.mxu0 0
    %759 = vmatpush1.bf16.msra.mxu0 0
    %760 = vmatprep.subr.bf16.mxu0 0
    %761 = vmatpush1.bf16.msra.mxu0 0
    %762 = vmatprep.subr.bf16.mxu0 0
    %763 = vmatpush1.bf16.msra.mxu0 0
    %764 = vmatprep.mubr.bf16.mxu0 0
    %765 = vmatmul.mubr.bf16.gmra.mrb[0].mxu0 %v730
    %v766 = vpop.f32.mrb[0].mxu0
    %v767 = vadd.f32 0.0, %v766
    %v768 = vpop.f32.mrb[0].mxu0
    %v769 = vpop.f32.mrb[0].mxu0
    %v770 = vpop.f32.mrb[0].mxu0
    %771 = vdwg.mxu0
    %v774 = vunpack.c.l.b16 %v723
    %v775 = vunpack.c.l.b16 %v724
    %v776 = vrot.slane %v774, 2
    %v777 = vrot.slane %v775, 1
    %v778 = vsel %vm317, %v777, %v776
    %v779 = vpack.c.b16 %v778, %v778
    %780 = vrot.lane.b32.xlu0 %v779, 64
    %v781 = vpop.permute.xlu0 %780
    %v783 = vsel %vm172, %v781, 0
    %785 = vmatprep.subr.bf16.mxu0 0
    %786 = vmatpush1.bf16.msra.mxu0 %v98
    %787 = vmatprep.subr.bf16.mxu0 0
    %788 = vmatpush1.bf16.msra.mxu0 %v99
    %789 = vmatprep.subr.bf16.mxu0 0
    %790 = vmatpush1.bf16.msra.mxu0 0
    %791 = vmatprep.subr.bf16.mxu0 0
    %792 = vmatpush1.bf16.msra.mxu0 0
    %793 = vmatprep.subr.bf16.mxu0 0
    %794 = vmatpush1.bf16.msra.mxu0 0
    %795 = vmatprep.subr.bf16.mxu0 0
    %796 = vmatpush1.bf16.msra.mxu0 0
    %797 = vmatprep.subr.bf16.mxu0 0
    %798 = vmatpush1.bf16.msra.mxu0 0
    %799 = vmatprep.subr.bf16.mxu0 0
    %800 = vmatpush1.bf16.msra.mxu0 0
    %801 = vmatprep.subr.bf16.mxu0 0
    %802 = vmatpush1.bf16.msra.mxu0 0
    %803 = vmatprep.subr.bf16.mxu0 0
    %804 = vmatpush1.bf16.msra.mxu0 0
    %805 = vmatprep.subr.bf16.mxu0 0
    %806 = vmatpush1.bf16.msra.mxu0 0
    %807 = vmatprep.subr.bf16.mxu0 0
    %808 = vmatpush1.bf16.msra.mxu0 0
    %809 = vmatprep.subr.bf16.mxu0 0
    %810 = vmatpush1.bf16.msra.mxu0 0
    %811 = vmatprep.subr.bf16.mxu0 0
    %812 = vmatpush1.bf16.msra.mxu0 0
    %813 = vmatprep.subr.bf16.mxu0 0
    %814 = vmatpush1.bf16.msra.mxu0 0
    %815 = vmatprep.subr.bf16.mxu0 0
    %816 = vmatpush1.bf16.msra.mxu0 0
    %817 = vmatprep.mubr.bf16.mxu0 0
    %818 = vmatmul.mubr.bf16.gmra.mrb[0].mxu0 %v783
    %v819 = vpop.f32.mrb[0].mxu0
    %v820 = vadd.f32 %v767, %v819
    %v821 = vpop.f32.mrb[0].mxu0
    %v822 = vpop.f32.mrb[0].mxu0
    %v823 = vpop.f32.mrb[0].mxu0
    %824 = vdwg.mxu0
    %v825 = vadd.f32 %v820, %v369
    %v826 = vxor.u32 %v825, 2147483648
    %v827 = vmul.f32 %v826, 1.442695
    %v828 = vpow.pop %v827
    %v829 = vadd.f32 %v828, 1.0
    %v830 = vrcp.pop %v829
    %v831 = vmul.f32 1.0, %v830
    %v832 = vtanh.pop %v825
    %v833 = vmul.f32 %v831, %v615
    %835 = vrot.lane.b32.xlu0 %v832, 32
    %v836 = vpop.permute.xlu0 %835
    %v838 = vmul.f32 %v831, %v836
    %840 = vrot.lane.b32.xlu0 %v838, 32
    %v841 = vpop.permute.xlu0 %840
    %v843 = vadd.f32 %v833, %v841
    %v844 = vtanh.pop %v843
    %846 = vrot.lane.b32.xlu0 %v844, 32
    %v847 = vpop.permute.xlu0 %846
    %v849 = vmul.f32 %v831, %v847
    %850 = vmatprep.subr.bf16.mxu0 0
    %851 = vmatpush1.bf16.msra.mxu0 %v104
    %852 = vmatprep.subr.bf16.mxu0 0
    %853 = vmatpush1.bf16.msra.mxu0 %v105
    %854 = vmatprep.subr.bf16.mxu0 0
    %855 = vmatpush1.bf16.msra.mxu0 0
    %856 = vmatprep.subr.bf16.mxu0 0
    %857 = vmatpush1.bf16.msra.mxu0 0
    %858 = vmatprep.subr.bf16.mxu0 0
    %859 = vmatpush1.bf16.msra.mxu0 0
    %860 = vmatprep.subr.bf16.mxu0 0
    %861 = vmatpush1.bf16.msra.mxu0 0
    %862 = vmatprep.subr.bf16.mxu0 0
    %863 = vmatpush1.bf16.msra.mxu0 0
    %864 = vmatprep.subr.bf16.mxu0 0
    %865 = vmatpush1.bf16.msra.mxu0 0
    %866 = vmatprep.subr.bf16.mxu0 0
    %867 = vmatpush1.bf16.msra.mxu0 0
    %868 = vmatprep.subr.bf16.mxu0 0
    %869 = vmatpush1.bf16.msra.mxu0 0
    %870 = vmatprep.subr.bf16.mxu0 0
    %871 = vmatpush1.bf16.msra.mxu0 0
    %872 = vmatprep.subr.bf16.mxu0 0
    %873 = vmatpush1.bf16.msra.mxu0 0
    %874 = vmatprep.subr.bf16.mxu0 0
    %875 = vmatpush1.bf16.msra.mxu0 0
    %876 = vmatprep.subr.bf16.mxu0 0
    %877 = vmatpush1.bf16.msra.mxu0 0
    %878 = vmatprep.subr.bf16.mxu0 0
    %879 = vmatpush1.bf16.msra.mxu0 0
    %880 = vmatprep.subr.bf16.mxu0 0
    %881 = vmatpush1.bf16.msra.mxu0 0
    %882 = vmatprep.mubr.bf16.mxu0 0
    %883 = vmatmul.mubr.bf16.gmra.mrb[0].mxu0 %v783
    %v884 = vpop.f32.mrb[0].mxu0
    %v885 = vadd.f32 0.0, %v884
    %v886 = vpop.f32.mrb[0].mxu0
    %v887 = vpop.f32.mrb[0].mxu0
    %v888 = vpop.f32.mrb[0].mxu0
    %889 = vdwg.mxu0
    %v891 = vrot.slane %v885, 5
    %v892 = vrot.slane %v885, 6
    %v895 = vadd.f32 %v170, %v891
    %v896 = vadd.f32 %v171, %v892
    %v897 = vxor.u32 %v895, 2147483648
    %v898 = vxor.u32 %v896, 2147483648
    %v899 = vmul.f32 %v897, 1.442695
    %v900 = vpow.pop %v899
    %v901 = vmul.f32 %v898, 1.442695
    %v902 = vpow.pop %v901
    %v903 = vadd.f32 %v900, 1.0
    %v904 = vadd.f32 %v902, 1.0
    %v905 = vrcp.pop %v903
    %v906 = vmul.f32 1.0, %v905
    %v907 = vrcp.pop %v904
    %v908 = vmul.f32 1.0, %v907
    %v909 = vtanh.pop %v895
    %v910 = vtanh.pop %v896
    %v913 = vrot.slane %v709, 7
    %v914 = vrot.slane %v710, 7
    %v917 = vmul.f32 %v906, %v913
    %v918 = vmul.f32 %v908, %v914
    %921 = vrot.lane.b32.xlu0 %v909, 32
    %v922 = vpop.permute.xlu0 %921
    %923 = vrot.lane.b32.xlu0 %v910, 32
    %v924 = vpop.permute.xlu0 %923
    %v927 = vmul.f32 %v906, %v922
    %v928 = vmul.f32 %v908, %v924
    %931 = vrot.lane.b32.xlu0 %v927, 32
    %v932 = vpop.permute.xlu0 %931
    %933 = vrot.lane.b32.xlu0 %v928, 32
    %v934 = vpop.permute.xlu0 %933
    %v937 = vadd.f32 %v917, %v932
    %v938 = vadd.f32 %v918, %v934
    %v939 = vtanh.pop %v937
    %v940 = vtanh.pop %v938
    %943 = vrot.lane.b32.xlu0 %v939, 32
    %v944 = vpop.permute.xlu0 %943
    %945 = vrot.lane.b32.xlu0 %v940, 32
    %v946 = vpop.permute.xlu0 %945
    %v949 = vmul.f32 %v906, %v944
    %v950 = vmul.f32 %v908, %v946
    %v951 = vpack.c.bf16 %v949, %v949
    %v952 = vpack.c.bf16 %v950, %v950
    %v953 = vpack.c.bf16 %v849, %v849
    %955 = vrot.lane.b32.xlu0 %v953, 64
    %v956 = vpop.permute.xlu0 %955
    %v958 = vsel %vm172, %v956, 0
    %960 = vmatprep.subr.bf16.mxu0 0
    %961 = vmatpush1.bf16.msra.mxu0 %v110
    %962 = vmatprep.subr.bf16.mxu0 0
    %963 = vmatpush1.bf16.msra.mxu0 %v111
    %964 = vmatprep.subr.bf16.mxu0 0
    %965 = vmatpush1.bf16.msra.mxu0 0
    %966 = vmatprep.subr.bf16.mxu0 0
    %967 = vmatpush1.bf16.msra.mxu0 0
    %968 = vmatprep.subr.bf16.mxu0 0
    %969 = vmatpush1.bf16.msra.mxu0 0
    %970 = vmatprep.subr.bf16.mxu0 0
    %971 = vmatpush1.bf16.msra.mxu0 0
    %972 = vmatprep.subr.bf16.mxu0 0
    %973 = vmatpush1.bf16.msra.mxu0 0
    %974 = vmatprep.subr.bf16.mxu0 0
    %975 = vmatpush1.bf16.msra.mxu0 0
    %976 = vmatprep.subr.bf16.mxu0 0
    %977 = vmatpush1.bf16.msra.mxu0 0
    %978 = vmatprep.subr.bf16.mxu0 0
    %979 = vmatpush1.bf16.msra.mxu0 0
    %980 = vmatprep.subr.bf16.mxu0 0
    %981 = vmatpush1.bf16.msra.mxu0 0
    %982 = vmatprep.subr.bf16.mxu0 0
    %983 = vmatpush1.bf16.msra.mxu0 0
    %984 = vmatprep.subr.bf16.mxu0 0
    %985 = vmatpush1.bf16.msra.mxu0 0
    %986 = vmatprep.subr.bf16.mxu0 0
    %987 = vmatpush1.bf16.msra.mxu0 0
    %988 = vmatprep.subr.bf16.mxu0 0
    %989 = vmatpush1.bf16.msra.mxu0 0
    %990 = vmatprep.subr.bf16.mxu0 0
    %991 = vmatpush1.bf16.msra.mxu0 0
    %992 = vmatprep.mubr.bf16.mxu0 0
    %993 = vmatmul.mubr.bf16.gmra.mrb[0].mxu0 %v958
    %v994 = vpop.f32.mrb[0].mxu0
    %v995 = vadd.f32 0.0, %v994
    %v996 = vpop.f32.mrb[0].mxu0
    %v997 = vpop.f32.mrb[0].mxu0
    %v998 = vpop.f32.mrb[0].mxu0
    %999 = vdwg.mxu0
    %v1002 = vunpack.c.l.b16 %v951
    %v1003 = vunpack.c.l.b16 %v952
    %v1004 = vrot.slane %v1002, 3
    %v1005 = vrot.slane %v1003, 2
    %v1006 = vsel %vm317, %v1005, %v1004
    %v1007 = vpack.c.b16 %v1006, %v1006
    %1008 = vrot.lane.b32.xlu0 %v1007, 64
    %v1009 = vpop.permute.xlu0 %1008
    %v1011 = vsel %vm172, %v1009, 0
    %1013 = vmatprep.subr.bf16.mxu0 0
    %1014 = vmatpush1.bf16.msra.mxu0 %v98
    %1015 = vmatprep.subr.bf16.mxu0 0
    %1016 = vmatpush1.bf16.msra.mxu0 %v99
    %1017 = vmatprep.subr.bf16.mxu0 0
    %1018 = vmatpush1.bf16.msra.mxu0 0
    %1019 = vmatprep.subr.bf16.mxu0 0
    %1020 = vmatpush1.bf16.msra.mxu0 0
    %1021 = vmatprep.subr.bf16.mxu0 0
    %1022 = vmatpush1.bf16.msra.mxu0 0
    %1023 = vmatprep.subr.bf16.mxu0 0
    %1024 = vmatpush1.bf16.msra.mxu0 0
    %1025 = vmatprep.subr.bf16.mxu0 0
    %1026 = vmatpush1.bf16.msra.mxu0 0
    %1027 = vmatprep.subr.bf16.mxu0 0
    %1028 = vmatpush1.bf16.msra.mxu0 0
    %1029 = vmatprep.subr.bf16.mxu0 0
    %1030 = vmatpush1.bf16.msra.mxu0 0
    %1031 = vmatprep.subr.bf16.mxu0 0
    %1032 = vmatpush1.bf16.msra.mxu0 0
    %1033 = vmatprep.subr.bf16.mxu0 0
    %1034 = vmatpush1.bf16.msra.mxu0 0
    %1035 = vmatprep.subr.bf16.mxu0 0
    %1036 = vmatpush1.bf16.msra.mxu0 0
    %1037 = vmatprep.subr.bf16.mxu0 0
    %1038 = vmatpush1.bf16.msra.mxu0 0
    %1039 = vmatprep.subr.bf16.mxu0 0
    %1040 = vmatpush1.bf16.msra.mxu0 0
    %1041 = vmatprep.subr.bf16.mxu0 0
    %1042 = vmatpush1.bf16.msra.mxu0 0
    %1043 = vmatprep.subr.bf16.mxu0 0
    %1044 = vmatpush1.bf16.msra.mxu0 0
    %1045 = vmatprep.mubr.bf16.mxu0 0
    %1046 = vmatmul.mubr.bf16.gmra.mrb[0].mxu0 %v1011
    %v1047 = vpop.f32.mrb[0].mxu0
    %v1048 = vadd.f32 %v995, %v1047
    %v1049 = vpop.f32.mrb[0].mxu0
    %v1050 = vpop.f32.mrb[0].mxu0
    %v1051 = vpop.f32.mrb[0].mxu0
    %1052 = vdwg.mxu0
    %v1053 = vadd.f32 %v1048, %v369
    %v1054 = vxor.u32 %v1053, 2147483648
    %v1055 = vmul.f32 %v1054, 1.442695
    %v1056 = vpow.pop %v1055
    %v1057 = vadd.f32 %v1056, 1.0
    %v1058 = vrcp.pop %v1057
    %v1059 = vmul.f32 1.0, %v1058
    %v1060 = vtanh.pop %v1053
    %v1061 = vmul.f32 %v1059, %v843
    %1063 = vrot.lane.b32.xlu0 %v1060, 32
    %v1064 = vpop.permute.xlu0 %1063
    %v1066 = vmul.f32 %v1059, %v1064
    %1068 = vrot.lane.b32.xlu0 %v1066, 32
    %v1069 = vpop.permute.xlu0 %1068
    %v1071 = vadd.f32 %v1061, %v1069
    %v1072 = vtanh.pop %v1071
    %1074 = vrot.lane.b32.xlu0 %v1072, 32
    %v1075 = vpop.permute.xlu0 %1074
    %v1077 = vmul.f32 %v1059, %v1075
    %1078 = vmatprep.subr.bf16.mxu0 0
    %1079 = vmatpush1.bf16.msra.mxu0 %v104
    %1080 = vmatprep.subr.bf16.mxu0 0
    %1081 = vmatpush1.bf16.msra.mxu0 %v105
    %1082 = vmatprep.subr.bf16.mxu0 0
    %1083 = vmatpush1.bf16.msra.mxu0 0
    %1084 = vmatprep.subr.bf16.mxu0 0
    %1085 = vmatpush1.bf16.msra.mxu0 0
    %1086 = vmatprep.subr.bf16.mxu0 0
    %1087 = vmatpush1.bf16.msra.mxu0 0
    %1088 = vmatprep.subr.bf16.mxu0 0
    %1089 = vmatpush1.bf16.msra.mxu0 0
    %1090 = vmatprep.subr.bf16.mxu0 0
    %1091 = vmatpush1.bf16.msra.mxu0 0
    %1092 = vmatprep.subr.bf16.mxu0 0
    %1093 = vmatpush1.bf16.msra.mxu0 0
    %1094 = vmatprep.subr.bf16.mxu0 0
    %1095 = vmatpush1.bf16.msra.mxu0 0
    %1096 = vmatprep.subr.bf16.mxu0 0
    %1097 = vmatpush1.bf16.msra.mxu0 0
    %1098 = vmatprep.subr.bf16.mxu0 0
    %1099 = vmatpush1.bf16.msra.mxu0 0
    %1100 = vmatprep.subr.bf16.mxu0 0
    %1101 = vmatpush1.bf16.msra.mxu0 0
    %1102 = vmatprep.subr.bf16.mxu0 0
    %1103 = vmatpush1.bf16.msra.mxu0 0
    %1104 = vmatprep.subr.bf16.mxu0 0
    %1105 = vmatpush1.bf16.msra.mxu0 0
    %1106 = vmatprep.subr.bf16.mxu0 0
    %1107 = vmatpush1.bf16.msra.mxu0 0
    %1108 = vmatprep.subr.bf16.mxu0 0
    %1109 = vmatpush1.bf16.msra.mxu0 0
    %1110 = vmatprep.mubr.bf16.mxu0 0
    %1111 = vmatmul.mubr.bf16.gmra.mrb[0].mxu0 %v1011
    %v1112 = vpop.f32.mrb[0].mxu0
    %v1113 = vadd.f32 0.0, %v1112
    %v1114 = vpop.f32.mrb[0].mxu0
    %v1115 = vpop.f32.mrb[0].mxu0
    %v1116 = vpop.f32.mrb[0].mxu0
    %1117 = vdwg.mxu0
    %v1119 = vrot.slane %v1113, 4
    %v1120 = vrot.slane %v1113, 5
    %v1123 = vadd.f32 %v170, %v1119
    %v1124 = vadd.f32 %v171, %v1120
    %v1125 = vxor.u32 %v1123, 2147483648
    %v1126 = vxor.u32 %v1124, 2147483648
    %v1127 = vmul.f32 %v1125, 1.442695
    %v1128 = vpow.pop %v1127
    %v1129 = vmul.f32 %v1126, 1.442695
    %v1130 = vpow.pop %v1129
    %v1131 = vadd.f32 %v1128, 1.0
    %v1132 = vadd.f32 %v1130, 1.0
    %v1133 = vrcp.pop %v1131
    %v1134 = vmul.f32 1.0, %v1133
    %v1135 = vrcp.pop %v1132
    %v1136 = vmul.f32 1.0, %v1135
    %v1137 = vtanh.pop %v1123
    %v1138 = vtanh.pop %v1124
    %v1141 = vrot.slane %v937, 7
    %v1142 = vrot.slane %v938, 7
    %v1145 = vmul.f32 %v1134, %v1141
    %v1146 = vmul.f32 %v1136, %v1142
    %1149 = vrot.lane.b32.xlu0 %v1137, 32
    %v1150 = vpop.permute.xlu0 %1149
    %1151 = vrot.lane.b32.xlu0 %v1138, 32
    %v1152 = vpop.permute.xlu0 %1151
    %v1155 = vmul.f32 %v1134, %v1150
    %v1156 = vmul.f32 %v1136, %v1152
    %1159 = vrot.lane.b32.xlu0 %v1155, 32
    %v1160 = vpop.permute.xlu0 %1159
    %1161 = vrot.lane.b32.xlu0 %v1156, 32
    %v1162 = vpop.permute.xlu0 %1161
    %v1165 = vadd.f32 %v1145, %v1160
    %v1166 = vadd.f32 %v1146, %v1162
    %v1167 = vtanh.pop %v1165
    %v1168 = vtanh.pop %v1166
    %1171 = vrot.lane.b32.xlu0 %v1167, 32
    %v1172 = vpop.permute.xlu0 %1171
    %1173 = vrot.lane.b32.xlu0 %v1168, 32
    %v1174 = vpop.permute.xlu0 %1173
    %v1177 = vmul.f32 %v1134, %v1172
    %v1178 = vmul.f32 %v1136, %v1174
    %v1179 = vpack.c.bf16 %v1177, %v1177
    %v1180 = vpack.c.bf16 %v1178, %v1178
    %v1181 = vpack.c.bf16 %v1077, %v1077
    %1183 = vrot.lane.b32.xlu0 %v1181, 64
    %v1184 = vpop.permute.xlu0 %1183
    %v1186 = vsel %vm172, %v1184, 0
    %1188 = vmatprep.subr.bf16.mxu0 0
    %1189 = vmatpush1.bf16.msra.mxu0 %v110
    %1190 = vmatprep.subr.bf16.mxu0 0
    %1191 = vmatpush1.bf16.msra.mxu0 %v111
    %1192 = vmatprep.subr.bf16.mxu0 0
    %1193 = vmatpush1.bf16.msra.mxu0 0
    %1194 = vmatprep.subr.bf16.mxu0 0
    %1195 = vmatpush1.bf16.msra.mxu0 0
    %1196 = vmatprep.subr.bf16.mxu0 0
    %1197 = vmatpush1.bf16.msra.mxu0 0
    %1198 = vmatprep.subr.bf16.mxu0 0
    %1199 = vmatpush1.bf16.msra.mxu0 0
    %1200 = vmatprep.subr.bf16.mxu0 0
    %1201 = vmatpush1.bf16.msra.mxu0 0
    %1202 = vmatprep.subr.bf16.mxu0 0
    %1203 = vmatpush1.bf16.msra.mxu0 0
    %1204 = vmatprep.subr.bf16.mxu0 0
    %1205 = vmatpush1.bf16.msra.mxu0 0
    %1206 = vmatprep.subr.bf16.mxu0 0
    %1207 = vmatpush1.bf16.msra.mxu0 0
    %1208 = vmatprep.subr.bf16.mxu0 0
    %1209 = vmatpush1.bf16.msra.mxu0 0
    %1210 = vmatprep.subr.bf16.mxu0 0
    %1211 = vmatpush1.bf16.msra.mxu0 0
    %1212 = vmatprep.subr.bf16.mxu0 0
    %1213 = vmatpush1.bf16.msra.mxu0 0
    %1214 = vmatprep.subr.bf16.mxu0 0
    %1215 = vmatpush1.bf16.msra.mxu0 0
    %1216 = vmatprep.subr.bf16.mxu0 0
    %1217 = vmatpush1.bf16.msra.mxu0 0
    %1218 = vmatprep.subr.bf16.mxu0 0
    %1219 = vmatpush1.bf16.msra.mxu0 0
    %1220 = vmatprep.mubr.bf16.mxu0 0
    %1221 = vmatmul.mubr.bf16.gmra.mrb[0].mxu0 %v1186
    %v1222 = vpop.f32.mrb[0].mxu0
    %v1223 = vadd.f32 0.0, %v1222
    %v1224 = vpop.f32.mrb[0].mxu0
    %v1225 = vpop.f32.mrb[0].mxu0
    %v1226 = vpop.f32.mrb[0].mxu0
    %1227 = vdwg.mxu0
    %v1230 = vunpack.c.l.b16 %v1179
    %v1231 = vunpack.c.l.b16 %v1180
    %v1232 = vrot.slane %v1230, 4
    %v1233 = vrot.slane %v1231, 3
    %v1234 = vsel %vm317, %v1233, %v1232
    %v1235 = vpack.c.b16 %v1234, %v1234
    %1236 = vrot.lane.b32.xlu0 %v1235, 64
    %v1237 = vpop.permute.xlu0 %1236
    %v1239 = vsel %vm172, %v1237, 0
    %1241 = vmatprep.subr.bf16.mxu0 0
    %1242 = vmatpush1.bf16.msra.mxu0 %v98
    %1243 = vmatprep.subr.bf16.mxu0 0
    %1244 = vmatpush1.bf16.msra.mxu0 %v99
    %1245 = vmatprep.subr.bf16.mxu0 0
    %1246 = vmatpush1.bf16.msra.mxu0 0
    %1247 = vmatprep.subr.bf16.mxu0 0
    %1248 = vmatpush1.bf16.msra.mxu0 0
    %1249 = vmatprep.subr.bf16.mxu0 0
    %1250 = vmatpush1.bf16.msra.mxu0 0
    %1251 = vmatprep.subr.bf16.mxu0 0
    %1252 = vmatpush1.bf16.msra.mxu0 0
    %1253 = vmatprep.subr.bf16.mxu0 0
    %1254 = vmatpush1.bf16.msra.mxu0 0
    %1255 = vmatprep.subr.bf16.mxu0 0
    %1256 = vmatpush1.bf16.msra.mxu0 0
    %1257 = vmatprep.subr.bf16.mxu0 0
    %1258 = vmatpush1.bf16.msra.mxu0 0
    %1259 = vmatprep.subr.bf16.mxu0 0
    %1260 = vmatpush1.bf16.msra.mxu0 0
    %1261 = vmatprep.subr.bf16.mxu0 0
    %1262 = vmatpush1.bf16.msra.mxu0 0
    %1263 = vmatprep.subr.bf16.mxu0 0
    %1264 = vmatpush1.bf16.msra.mxu0 0
    %1265 = vmatprep.subr.bf16.mxu0 0
    %1266 = vmatpush1.bf16.msra.mxu0 0
    %1267 = vmatprep.subr.bf16.mxu0 0
    %1268 = vmatpush1.bf16.msra.mxu0 0
    %1269 = vmatprep.subr.bf16.mxu0 0
    %1270 = vmatpush1.bf16.msra.mxu0 0
    %1271 = vmatprep.subr.bf16.mxu0 0
    %1272 = vmatpush1.bf16.msra.mxu0 0
    %1273 = vmatprep.mubr.bf16.mxu0 0
    %1274 = vmatmul.mubr.bf16.gmra.mrb[0].mxu0 %v1239
    %v1275 = vpop.f32.mrb[0].mxu0
    %v1276 = vadd.f32 %v1223, %v1275
    %v1277 = vpop.f32.mrb[0].mxu0
    %v1278 = vpop.f32.mrb[0].mxu0
    %v1279 = vpop.f32.mrb[0].mxu0
    %1280 = vdwg.mxu0
    %v1281 = vadd.f32 %v1276, %v369
    %v1282 = vxor.u32 %v1281, 2147483648
    %v1283 = vmul.f32 %v1282, 1.442695
    %v1284 = vpow.pop %v1283
    %v1285 = vadd.f32 %v1284, 1.0
    %v1286 = vrcp.pop %v1285
    %v1287 = vmul.f32 1.0, %v1286
    %v1288 = vtanh.pop %v1281
    %v1289 = vmul.f32 %v1287, %v1071
    %1291 = vrot.lane.b32.xlu0 %v1288, 32
    %v1292 = vpop.permute.xlu0 %1291
    %v1294 = vmul.f32 %v1287, %v1292
    %1296 = vrot.lane.b32.xlu0 %v1294, 32
    %v1297 = vpop.permute.xlu0 %1296
    %v1299 = vadd.f32 %v1289, %v1297
    %v1300 = vtanh.pop %v1299
    %1302 = vrot.lane.b32.xlu0 %v1300, 32
    %v1303 = vpop.permute.xlu0 %1302
    %v1305 = vmul.f32 %v1287, %v1303
    %1306 = vmatprep.subr.bf16.mxu0 0
    %1307 = vmatpush1.bf16.msra.mxu0 %v104
    %1308 = vmatprep.subr.bf16.mxu0 0
    %1309 = vmatpush1.bf16.msra.mxu0 %v105
    %1310 = vmatprep.subr.bf16.mxu0 0
    %1311 = vmatpush1.bf16.msra.mxu0 0
    %1312 = vmatprep.subr.bf16.mxu0 0
    %1313 = vmatpush1.bf16.msra.mxu0 0
    %1314 = vmatprep.subr.bf16.mxu0 0
    %1315 = vmatpush1.bf16.msra.mxu0 0
    %1316 = vmatprep.subr.bf16.mxu0 0
    %1317 = vmatpush1.bf16.msra.mxu0 0
    %1318 = vmatprep.subr.bf16.mxu0 0
    %1319 = vmatpush1.bf16.msra.mxu0 0
    %1320 = vmatprep.subr.bf16.mxu0 0
    %1321 = vmatpush1.bf16.msra.mxu0 0
    %1322 = vmatprep.subr.bf16.mxu0 0
    %1323 = vmatpush1.bf16.msra.mxu0 0
    %1324 = vmatprep.subr.bf16.mxu0 0
    %1325 = vmatpush1.bf16.msra.mxu0 0
    %1326 = vmatprep.subr.bf16.mxu0 0
    %1327 = vmatpush1.bf16.msra.mxu0 0
    %1328 = vmatprep.subr.bf16.mxu0 0
    %1329 = vmatpush1.bf16.msra.mxu0 0
    %1330 = vmatprep.subr.bf16.mxu0 0
    %1331 = vmatpush1.bf16.msra.mxu0 0
    %1332 = vmatprep.subr.bf16.mxu0 0
    %1333 = vmatpush1.bf16.msra.mxu0 0
    %1334 = vmatprep.subr.bf16.mxu0 0
    %1335 = vmatpush1.bf16.msra.mxu0 0
    %1336 = vmatprep.subr.bf16.mxu0 0
    %1337 = vmatpush1.bf16.msra.mxu0 0
    %1338 = vmatprep.mubr.bf16.mxu0 0
    %1339 = vmatmul.mubr.bf16.gmra.mrb[0].mxu0 %v1239
    %v1340 = vpop.f32.mrb[0].mxu0
    %v1341 = vadd.f32 0.0, %v1340
    %v1342 = vpop.f32.mrb[0].mxu0
    %v1343 = vpop.f32.mrb[0].mxu0
    %v1344 = vpop.f32.mrb[0].mxu0
    %1345 = vdwg.mxu0
    %v1347 = vrot.slane %v1341, 3
    %v1348 = vrot.slane %v1341, 4
    %v1351 = vadd.f32 %v170, %v1347
    %v1352 = vadd.f32 %v171, %v1348
    %v1353 = vxor.u32 %v1351, 2147483648
    %v1354 = vxor.u32 %v1352, 2147483648
    %v1355 = vmul.f32 %v1353, 1.442695
    %v1356 = vpow.pop %v1355
    %v1357 = vmul.f32 %v1354, 1.442695
    %v1358 = vpow.pop %v1357
    %v1359 = vadd.f32 %v1356, 1.0
    %v1360 = vadd.f32 %v1358, 1.0
    %v1361 = vrcp.pop %v1359
    %v1362 = vmul.f32 1.0, %v1361
    %v1363 = vrcp.pop %v1360
    %v1364 = vmul.f32 1.0, %v1363
    %v1365 = vtanh.pop %v1351
    %v1366 = vtanh.pop %v1352
    %v1369 = vrot.slane %v1165, 7
    %v1370 = vrot.slane %v1166, 7
    %v1373 = vmul.f32 %v1362, %v1369
    %v1374 = vmul.f32 %v1364, %v1370
    %1377 = vrot.lane.b32.xlu0 %v1365, 32
    %v1378 = vpop.permute.xlu0 %1377
    %1379 = vrot.lane.b32.xlu0 %v1366, 32
    %v1380 = vpop.permute.xlu0 %1379
    %v1383 = vmul.f32 %v1362, %v1378
    %v1384 = vmul.f32 %v1364, %v1380
    %1387 = vrot.lane.b32.xlu0 %v1383, 32
    %v1388 = vpop.permute.xlu0 %1387
    %1389 = vrot.lane.b32.xlu0 %v1384, 32
    %v1390 = vpop.permute.xlu0 %1389
    %v1393 = vadd.f32 %v1373, %v1388
    %v1394 = vadd.f32 %v1374, %v1390
    %v1395 = vtanh.pop %v1393
    %v1396 = vtanh.pop %v1394
    %1399 = vrot.lane.b32.xlu0 %v1395, 32
    %v1400 = vpop.permute.xlu0 %1399
    %1401 = vrot.lane.b32.xlu0 %v1396, 32
    %v1402 = vpop.permute.xlu0 %1401
    %v1405 = vmul.f32 %v1362, %v1400
    %v1406 = vmul.f32 %v1364, %v1402
    %v1407 = vpack.c.bf16 %v1405, %v1405
    %v1408 = vpack.c.bf16 %v1406, %v1406
    %v1409 = vpack.c.bf16 %v1305, %v1305
    %1411 = vrot.lane.b32.xlu0 %v1409, 64
    %v1412 = vpop.permute.xlu0 %1411
    %v1414 = vsel %vm172, %v1412, 0
    %1416 = vmatprep.subr.bf16.mxu0 0
    %1417 = vmatpush1.bf16.msra.mxu0 %v110
    %1418 = vmatprep.subr.bf16.mxu0 0
    %1419 = vmatpush1.bf16.msra.mxu0 %v111
    %1420 = vmatprep.subr.bf16.mxu0 0
    %1421 = vmatpush1.bf16.msra.mxu0 0
    %1422 = vmatprep.subr.bf16.mxu0 0
    %1423 = vmatpush1.bf16.msra.mxu0 0
    %1424 = vmatprep.subr.bf16.mxu0 0
    %1425 = vmatpush1.bf16.msra.mxu0 0
    %1426 = vmatprep.subr.bf16.mxu0 0
    %1427 = vmatpush1.bf16.msra.mxu0 0
    %1428 = vmatprep.subr.bf16.mxu0 0
    %1429 = vmatpush1.bf16.msra.mxu0 0
    %1430 = vmatprep.subr.bf16.mxu0 0
    %1431 = vmatpush1.bf16.msra.mxu0 0
    %1432 = vmatprep.subr.bf16.mxu0 0
    %1433 = vmatpush1.bf16.msra.mxu0 0
    %1434 = vmatprep.subr.bf16.mxu0 0
    %1435 = vmatpush1.bf16.msra.mxu0 0
    %1436 = vmatprep.subr.bf16.mxu0 0
    %1437 = vmatpush1.bf16.msra.mxu0 0
    %1438 = vmatprep.subr.bf16.mxu0 0
    %1439 = vmatpush1.bf16.msra.mxu0 0
    %1440 = vmatprep.subr.bf16.mxu0 0
    %1441 = vmatpush1.bf16.msra.mxu0 0
    %1442 = vmatprep.subr.bf16.mxu0 0
    %1443 = vmatpush1.bf16.msra.mxu0 0
    %1444 = vmatprep.subr.bf16.mxu0 0
    %1445 = vmatpush1.bf16.msra.mxu0 0
    %1446 = vmatprep.subr.bf16.mxu0 0
    %1447 = vmatpush1.bf16.msra.mxu0 0
    %1448 = vmatprep.mubr.bf16.mxu0 0
    %1449 = vmatmul.mubr.bf16.gmra.mrb[0].mxu0 %v1414
    %v1450 = vpop.f32.mrb[0].mxu0
    %v1451 = vadd.f32 0.0, %v1450
    %v1452 = vpop.f32.mrb[0].mxu0
    %v1453 = vpop.f32.mrb[0].mxu0
    %v1454 = vpop.f32.mrb[0].mxu0
    %1455 = vdwg.mxu0
    %v1458 = vunpack.c.l.b16 %v1407
    %v1459 = vunpack.c.l.b16 %v1408
    %v1460 = vrot.slane %v1458, 5
    %v1461 = vrot.slane %v1459, 4
    %v1462 = vsel %vm317, %v1461, %v1460
    %v1463 = vpack.c.b16 %v1462, %v1462
    %1464 = vrot.lane.b32.xlu0 %v1463, 64
    %v1465 = vpop.permute.xlu0 %1464
    %v1467 = vsel %vm172, %v1465, 0
    %1469 = vmatprep.subr.bf16.mxu0 0
    %1470 = vmatpush1.bf16.msra.mxu0 %v98
    %1471 = vmatprep.subr.bf16.mxu0 0
    %1472 = vmatpush1.bf16.msra.mxu0 %v99
    %1473 = vmatprep.subr.bf16.mxu0 0
    %1474 = vmatpush1.bf16.msra.mxu0 0
    %1475 = vmatprep.subr.bf16.mxu0 0
    %1476 = vmatpush1.bf16.msra.mxu0 0
    %1477 = vmatprep.subr.bf16.mxu0 0
    %1478 = vmatpush1.bf16.msra.mxu0 0
    %1479 = vmatprep.subr.bf16.mxu0 0
    %1480 = vmatpush1.bf16.msra.mxu0 0
    %1481 = vmatprep.subr.bf16.mxu0 0
    %1482 = vmatpush1.bf16.msra.mxu0 0
    %1483 = vmatprep.subr.bf16.mxu0 0
    %1484 = vmatpush1.bf16.msra.mxu0 0
    %1485 = vmatprep.subr.bf16.mxu0 0
    %1486 = vmatpush1.bf16.msra.mxu0 0
    %1487 = vmatprep.subr.bf16.mxu0 0
    %1488 = vmatpush1.bf16.msra.mxu0 0
    %1489 = vmatprep.subr.bf16.mxu0 0
    %1490 = vmatpush1.bf16.msra.mxu0 0
    %1491 = vmatprep.subr.bf16.mxu0 0
    %1492 = vmatpush1.bf16.msra.mxu0 0
    %1493 = vmatprep.subr.bf16.mxu0 0
    %1494 = vmatpush1.bf16.msra.mxu0 0
    %1495 = vmatprep.subr.bf16.mxu0 0
    %1496 = vmatpush1.bf16.msra.mxu0 0
    %1497 = vmatprep.subr.bf16.mxu0 0
    %1498 = vmatpush1.bf16.msra.mxu0 0
    %1499 = vmatprep.subr.bf16.mxu0 0
    %1500 = vmatpush1.bf16.msra.mxu0 0
    %1501 = vmatprep.mubr.bf16.mxu0 0
    %1502 = vmatmul.mubr.bf16.gmra.mrb[0].mxu0 %v1467
    %v1503 = vpop.f32.mrb[0].mxu0
    %v1504 = vadd.f32 %v1451, %v1503
    %v1505 = vpop.f32.mrb[0].mxu0
    %v1506 = vpop.f32.mrb[0].mxu0
    %v1507 = vpop.f32.mrb[0].mxu0
    %1508 = vdwg.mxu0
    %v1509 = vadd.f32 %v1504, %v369
    %v1510 = vxor.u32 %v1509, 2147483648
    %v1511 = vmul.f32 %v1510, 1.442695
    %v1512 = vpow.pop %v1511
    %v1513 = vadd.f32 %v1512, 1.0
    %v1514 = vrcp.pop %v1513
    %v1515 = vmul.f32 1.0, %v1514
    %v1516 = vtanh.pop %v1509
    %v1517 = vmul.f32 %v1515, %v1299
    %1519 = vrot.lane.b32.xlu0 %v1516, 32
    %v1520 = vpop.permute.xlu0 %1519
    %v1522 = vmul.f32 %v1515, %v1520
    %1524 = vrot.lane.b32.xlu0 %v1522, 32
    %v1525 = vpop.permute.xlu0 %1524
    %v1527 = vadd.f32 %v1517, %v1525
    %v1528 = vtanh.pop %v1527
    %1530 = vrot.lane.b32.xlu0 %v1528, 32
    %v1531 = vpop.permute.xlu0 %1530
    %v1533 = vmul.f32 %v1515, %v1531
    %1534 = vmatprep.subr.bf16.mxu0 0
    %1535 = vmatpush1.bf16.msra.mxu0 %v104
    %1536 = vmatprep.subr.bf16.mxu0 0
    %1537 = vmatpush1.bf16.msra.mxu0 %v105
    %1538 = vmatprep.subr.bf16.mxu0 0
    %1539 = vmatpush1.bf16.msra.mxu0 0
    %1540 = vmatprep.subr.bf16.mxu0 0
    %1541 = vmatpush1.bf16.msra.mxu0 0
    %1542 = vmatprep.subr.bf16.mxu0 0
    %1543 = vmatpush1.bf16.msra.mxu0 0
    %1544 = vmatprep.subr.bf16.mxu0 0
    %1545 = vmatpush1.bf16.msra.mxu0 0
    %1546 = vmatprep.subr.bf16.mxu0 0
    %1547 = vmatpush1.bf16.msra.mxu0 0
    %1548 = vmatprep.subr.bf16.mxu0 0
    %1549 = vmatpush1.bf16.msra.mxu0 0
    %1550 = vmatprep.subr.bf16.mxu0 0
    %1551 = vmatpush1.bf16.msra.mxu0 0
    %1552 = vmatprep.subr.bf16.mxu0 0
    %1553 = vmatpush1.bf16.msra.mxu0 0
    %1554 = vmatprep.subr.bf16.mxu0 0
    %1555 = vmatpush1.bf16.msra.mxu0 0
    %1556 = vmatprep.subr.bf16.mxu0 0
    %1557 = vmatpush1.bf16.msra.mxu0 0
    %1558 = vmatprep.subr.bf16.mxu0 0
    %1559 = vmatpush1.bf16.msra.mxu0 0
    %1560 = vmatprep.subr.bf16.mxu0 0
    %1561 = vmatpush1.bf16.msra.mxu0 0
    %1562 = vmatprep.subr.bf16.mxu0 0
    %1563 = vmatpush1.bf16.msra.mxu0 0
    %1564 = vmatprep.subr.bf16.mxu0 0
    %1565 = vmatpush1.bf16.msra.mxu0 0
    %1566 = vmatprep.mubr.bf16.mxu0 0
    %1567 = vmatmul.mubr.bf16.gmra.mrb[0].mxu0 %v1467
    %v1568 = vpop.f32.mrb[0].mxu0
    %v1569 = vadd.f32 0.0, %v1568
    %v1570 = vpop.f32.mrb[0].mxu0
    %v1571 = vpop.f32.mrb[0].mxu0
    %v1572 = vpop.f32.mrb[0].mxu0
    %1573 = vdwg.mxu0
    %v1575 = vrot.slane %v1569, 2
    %v1576 = vrot.slane %v1569, 3
    %v1579 = vadd.f32 %v170, %v1575
    %v1580 = vadd.f32 %v171, %v1576
    %v1581 = vxor.u32 %v1579, 2147483648
    %v1582 = vxor.u32 %v1580, 2147483648
    %v1583 = vmul.f32 %v1581, 1.442695
    %v1584 = vpow.pop %v1583
    %v1585 = vmul.f32 %v1582, 1.442695
    %v1586 = vpow.pop %v1585
    %v1587 = vadd.f32 %v1584, 1.0
    %v1588 = vadd.f32 %v1586, 1.0
    %v1589 = vrcp.pop %v1587
    %v1590 = vmul.f32 1.0, %v1589
    %v1591 = vrcp.pop %v1588
    %v1592 = vmul.f32 1.0, %v1591
    %v1593 = vtanh.pop %v1579
    %v1594 = vtanh.pop %v1580
    %v1597 = vrot.slane %v1393, 7
    %v1598 = vrot.slane %v1394, 7
    %v1601 = vmul.f32 %v1590, %v1597
    %v1602 = vmul.f32 %v1592, %v1598
    %1605 = vrot.lane.b32.xlu0 %v1593, 32
    %v1606 = vpop.permute.xlu0 %1605
    %1607 = vrot.lane.b32.xlu0 %v1594, 32
    %v1608 = vpop.permute.xlu0 %1607
    %v1611 = vmul.f32 %v1590, %v1606
    %v1612 = vmul.f32 %v1592, %v1608
    %1615 = vrot.lane.b32.xlu0 %v1611, 32
    %v1616 = vpop.permute.xlu0 %1615
    %1617 = vrot.lane.b32.xlu0 %v1612, 32
    %v1618 = vpop.permute.xlu0 %1617
    %v1621 = vadd.f32 %v1601, %v1616
    %v1622 = vadd.f32 %v1602, %v1618
    %v1623 = vtanh.pop %v1621
    %v1624 = vtanh.pop %v1622
    %1627 = vrot.lane.b32.xlu0 %v1623, 32
    %v1628 = vpop.permute.xlu0 %1627
    %1629 = vrot.lane.b32.xlu0 %v1624, 32
    %v1630 = vpop.permute.xlu0 %1629
    %v1633 = vmul.f32 %v1590, %v1628
    %v1634 = vmul.f32 %v1592, %v1630
    %v1635 = vpack.c.bf16 %v1633, %v1633
    %v1636 = vpack.c.bf16 %v1634, %v1634
    %v1637 = vpack.c.bf16 %v1533, %v1533
    %1639 = vrot.lane.b32.xlu0 %v1637, 64
    %v1640 = vpop.permute.xlu0 %1639
    %v1642 = vsel %vm172, %v1640, 0
    %1644 = vmatprep.subr.bf16.mxu0 0
    %1645 = vmatpush1.bf16.msra.mxu0 %v110
    %1646 = vmatprep.subr.bf16.mxu0 0
    %1647 = vmatpush1.bf16.msra.mxu0 %v111
    %1648 = vmatprep.subr.bf16.mxu0 0
    %1649 = vmatpush1.bf16.msra.mxu0 0
    %1650 = vmatprep.subr.bf16.mxu0 0
    %1651 = vmatpush1.bf16.msra.mxu0 0
    %1652 = vmatprep.subr.bf16.mxu0 0
    %1653 = vmatpush1.bf16.msra.mxu0 0
    %1654 = vmatprep.subr.bf16.mxu0 0
    %1655 = vmatpush1.bf16.msra.mxu0 0
    %1656 = vmatprep.subr.bf16.mxu0 0
    %1657 = vmatpush1.bf16.msra.mxu0 0
    %1658 = vmatprep.subr.bf16.mxu0 0
    %1659 = vmatpush1.bf16.msra.mxu0 0
    %1660 = vmatprep.subr.bf16.mxu0 0
    %1661 = vmatpush1.bf16.msra.mxu0 0
    %1662 = vmatprep.subr.bf16.mxu0 0
    %1663 = vmatpush1.bf16.msra.mxu0 0
    %1664 = vmatprep.subr.bf16.mxu0 0
    %1665 = vmatpush1.bf16.msra.mxu0 0
    %1666 = vmatprep.subr.bf16.mxu0 0
    %1667 = vmatpush1.bf16.msra.mxu0 0
    %1668 = vmatprep.subr.bf16.mxu0 0
    %1669 = vmatpush1.bf16.msra.mxu0 0
    %1670 = vmatprep.subr.bf16.mxu0 0
    %1671 = vmatpush1.bf16.msra.mxu0 0
    %1672 = vmatprep.subr.bf16.mxu0 0
    %1673 = vmatpush1.bf16.msra.mxu0 0
    %1674 = vmatprep.subr.bf16.mxu0 0
    %1675 = vmatpush1.bf16.msra.mxu0 0
    %1676 = vmatprep.mubr.bf16.mxu0 0
    %1677 = vmatmul.mubr.bf16.gmra.mrb[0].mxu0 %v1642
    %v1678 = vpop.f32.mrb[0].mxu0
    %v1679 = vadd.f32 0.0, %v1678
    %v1680 = vpop.f32.mrb[0].mxu0
    %v1681 = vpop.f32.mrb[0].mxu0
    %v1682 = vpop.f32.mrb[0].mxu0
    %1683 = vdwg.mxu0
    %v1686 = vunpack.c.l.b16 %v1635
    %v1687 = vunpack.c.l.b16 %v1636
    %v1688 = vrot.slane %v1686, 6
    %v1689 = vrot.slane %v1687, 5
    %v1690 = vsel %vm317, %v1689, %v1688
    %v1691 = vpack.c.b16 %v1690, %v1690
    %1692 = vrot.lane.b32.xlu0 %v1691, 64
    %v1693 = vpop.permute.xlu0 %1692
    %v1695 = vsel %vm172, %v1693, 0
    %1697 = vmatprep.subr.bf16.mxu0 0
    %1698 = vmatpush1.bf16.msra.mxu0 %v98
    %1699 = vmatprep.subr.bf16.mxu0 0
    %1700 = vmatpush1.bf16.msra.mxu0 %v99
    %1701 = vmatprep.subr.bf16.mxu0 0
    %1702 = vmatpush1.bf16.msra.mxu0 0
    %1703 = vmatprep.subr.bf16.mxu0 0
    %1704 = vmatpush1.bf16.msra.mxu0 0
    %1705 = vmatprep.subr.bf16.mxu0 0
    %1706 = vmatpush1.bf16.msra.mxu0 0
    %1707 = vmatprep.subr.bf16.mxu0 0
    %1708 = vmatpush1.bf16.msra.mxu0 0
    %1709 = vmatprep.subr.bf16.mxu0 0
    %1710 = vmatpush1.bf16.msra.mxu0 0
    %1711 = vmatprep.subr.bf16.mxu0 0
    %1712 = vmatpush1.bf16.msra.mxu0 0
    %1713 = vmatprep.subr.bf16.mxu0 0
    %1714 = vmatpush1.bf16.msra.mxu0 0
    %1715 = vmatprep.subr.bf16.mxu0 0
    %1716 = vmatpush1.bf16.msra.mxu0 0
    %1717 = vmatprep.subr.bf16.mxu0 0
    %1718 = vmatpush1.bf16.msra.mxu0 0
    %1719 = vmatprep.subr.bf16.mxu0 0
    %1720 = vmatpush1.bf16.msra.mxu0 0
    %1721 = vmatprep.subr.bf16.mxu0 0
    %1722 = vmatpush1.bf16.msra.mxu0 0
    %1723 = vmatprep.subr.bf16.mxu0 0
    %1724 = vmatpush1.bf16.msra.mxu0 0
    %1725 = vmatprep.subr.bf16.mxu0 0
    %1726 = vmatpush1.bf16.msra.mxu0 0
    %1727 = vmatprep.subr.bf16.mxu0 0
    %1728 = vmatpush1.bf16.msra.mxu0 0
    %1729 = vmatprep.mubr.bf16.mxu0 0
    %1730 = vmatmul.mubr.bf16.gmra.mrb[0].mxu0 %v1695
    %v1731 = vpop.f32.mrb[0].mxu0
    %v1732 = vadd.f32 %v1679, %v1731
    %v1733 = vpop.f32.mrb[0].mxu0
    %v1734 = vpop.f32.mrb[0].mxu0
    %v1735 = vpop.f32.mrb[0].mxu0
    %1736 = vdwg.mxu0
    %v1737 = vadd.f32 %v1732, %v369
    %v1738 = vxor.u32 %v1737, 2147483648
    %v1739 = vmul.f32 %v1738, 1.442695
    %v1740 = vpow.pop %v1739
    %v1741 = vadd.f32 %v1740, 1.0
    %v1742 = vrcp.pop %v1741
    %v1743 = vmul.f32 1.0, %v1742
    %v1744 = vtanh.pop %v1737
    %v1745 = vmul.f32 %v1743, %v1527
    %1747 = vrot.lane.b32.xlu0 %v1744, 32
    %v1748 = vpop.permute.xlu0 %1747
    %v1750 = vmul.f32 %v1743, %v1748
    %1752 = vrot.lane.b32.xlu0 %v1750, 32
    %v1753 = vpop.permute.xlu0 %1752
    %v1755 = vadd.f32 %v1745, %v1753
    %v1756 = vtanh.pop %v1755
    %1758 = vrot.lane.b32.xlu0 %v1756, 32
    %v1759 = vpop.permute.xlu0 %1758
    %v1761 = vmul.f32 %v1743, %v1759
    %1762 = vmatprep.subr.bf16.mxu0 0
    %1763 = vmatpush1.bf16.msra.mxu0 %v104
    %1764 = vmatprep.subr.bf16.mxu0 0
    %1765 = vmatpush1.bf16.msra.mxu0 %v105
    %1766 = vmatprep.subr.bf16.mxu0 0
    %1767 = vmatpush1.bf16.msra.mxu0 0
    %1768 = vmatprep.subr.bf16.mxu0 0
    %1769 = vmatpush1.bf16.msra.mxu0 0
    %1770 = vmatprep.subr.bf16.mxu0 0
    %1771 = vmatpush1.bf16.msra.mxu0 0
    %1772 = vmatprep.subr.bf16.mxu0 0
    %1773 = vmatpush1.bf16.msra.mxu0 0
    %1774 = vmatprep.subr.bf16.mxu0 0
    %1775 = vmatpush1.bf16.msra.mxu0 0
    %1776 = vmatprep.subr.bf16.mxu0 0
    %1777 = vmatpush1.bf16.msra.mxu0 0
    %1778 = vmatprep.subr.bf16.mxu0 0
    %1779 = vmatpush1.bf16.msra.mxu0 0
    %1780 = vmatprep.subr.bf16.mxu0 0
    %1781 = vmatpush1.bf16.msra.mxu0 0
    %1782 = vmatprep.subr.bf16.mxu0 0
    %1783 = vmatpush1.bf16.msra.mxu0 0
    %1784 = vmatprep.subr.bf16.mxu0 0
    %1785 = vmatpush1.bf16.msra.mxu0 0
    %1786 = vmatprep.subr.bf16.mxu0 0
    %1787 = vmatpush1.bf16.msra.mxu0 0
    %1788 = vmatprep.subr.bf16.mxu0 0
    %1789 = vmatpush1.bf16.msra.mxu0 0
    %1790 = vmatprep.subr.bf16.mxu0 0
    %1791 = vmatpush1.bf16.msra.mxu0 0
    %1792 = vmatprep.subr.bf16.mxu0 0
    %1793 = vmatpush1.bf16.msra.mxu0 0
    %1794 = vmatprep.mubr.bf16.mxu0 0
    %1795 = vmatmul.mubr.bf16.gmra.mrb[0].mxu0 %v1695
    %v1796 = vpop.f32.mrb[0].mxu0
    %v1797 = vadd.f32 0.0, %v1796
    %v1798 = vpop.f32.mrb[0].mxu0
    %v1799 = vpop.f32.mrb[0].mxu0
    %v1800 = vpop.f32.mrb[0].mxu0
    %1801 = vdwg.mxu0
    %v1803 = vrot.slane %v1797, 1
    %v1804 = vrot.slane %v1797, 2
    %v1807 = vadd.f32 %v170, %v1803
    %v1808 = vadd.f32 %v171, %v1804
    %v1809 = vxor.u32 %v1807, 2147483648
    %v1810 = vxor.u32 %v1808, 2147483648
    %v1811 = vmul.f32 %v1809, 1.442695
    %v1812 = vpow.pop %v1811
    %v1813 = vmul.f32 %v1810, 1.442695
    %v1814 = vpow.pop %v1813
    %v1815 = vadd.f32 %v1812, 1.0
    %v1816 = vadd.f32 %v1814, 1.0
    %v1817 = vrcp.pop %v1815
    %v1818 = vmul.f32 1.0, %v1817
    %v1819 = vrcp.pop %v1816
    %v1820 = vmul.f32 1.0, %v1819
    %v1821 = vtanh.pop %v1807
    %v1822 = vtanh.pop %v1808
    %v1825 = vrot.slane %v1621, 7
    %v1826 = vrot.slane %v1622, 7
    %v1829 = vmul.f32 %v1818, %v1825
    %v1830 = vmul.f32 %v1820, %v1826
    %1833 = vrot.lane.b32.xlu0 %v1821, 32
    %v1834 = vpop.permute.xlu0 %1833
    %1835 = vrot.lane.b32.xlu0 %v1822, 32
    %v1836 = vpop.permute.xlu0 %1835
    %v1839 = vmul.f32 %v1818, %v1834
    %v1840 = vmul.f32 %v1820, %v1836
    %1843 = vrot.lane.b32.xlu0 %v1839, 32
    %v1844 = vpop.permute.xlu0 %1843
    %1845 = vrot.lane.b32.xlu0 %v1840, 32
    %v1846 = vpop.permute.xlu0 %1845
    %v1849 = vadd.f32 %v1829, %v1844
    %v1850 = vadd.f32 %v1830, %v1846
    %v1851 = vtanh.pop %v1849
    %v1852 = vtanh.pop %v1850
    %1855 = vrot.lane.b32.xlu0 %v1851, 32
    %v1856 = vpop.permute.xlu0 %1855
    %1857 = vrot.lane.b32.xlu0 %v1852, 32
    %v1858 = vpop.permute.xlu0 %1857
    %v1861 = vmul.f32 %v1818, %v1856
    %v1862 = vmul.f32 %v1820, %v1858
    %v1863 = vpack.c.bf16 %v1861, %v1861
    %v1864 = vpack.c.bf16 %v1862, %v1862
    %v1865 = vpack.c.bf16 %v1761, %v1761
    %1867 = vrot.lane.b32.xlu0 %v1865, 64
    %v1868 = vpop.permute.xlu0 %1867
    %v1870 = vsel %vm172, %v1868, 0
    %1872 = vmatprep.subr.bf16.mxu0 0
    %1873 = vmatpush1.bf16.msra.mxu0 %v110
    %1874 = vmatprep.subr.bf16.mxu0 0
    %1875 = vmatpush1.bf16.msra.mxu0 %v111
    %1876 = vmatprep.subr.bf16.mxu0 0
    %1877 = vmatpush1.bf16.msra.mxu0 0
    %1878 = vmatprep.subr.bf16.mxu0 0
    %1879 = vmatpush1.bf16.msra.mxu0 0
    %1880 = vmatprep.subr.bf16.mxu0 0
    %1881 = vmatpush1.bf16.msra.mxu0 0
    %1882 = vmatprep.subr.bf16.mxu0 0
    %1883 = vmatpush1.bf16.msra.mxu0 0
    %1884 = vmatprep.subr.bf16.mxu0 0
    %1885 = vmatpush1.bf16.msra.mxu0 0
    %1886 = vmatprep.subr.bf16.mxu0 0
    %1887 = vmatpush1.bf16.msra.mxu0 0
    %1888 = vmatprep.subr.bf16.mxu0 0
    %1889 = vmatpush1.bf16.msra.mxu0 0
    %1890 = vmatprep.subr.bf16.mxu0 0
    %1891 = vmatpush1.bf16.msra.mxu0 0
    %1892 = vmatprep.subr.bf16.mxu0 0
    %1893 = vmatpush1.bf16.msra.mxu0 0
    %1894 = vmatprep.subr.bf16.mxu0 0
    %1895 = vmatpush1.bf16.msra.mxu0 0
    %1896 = vmatprep.subr.bf16.mxu0 0
    %1897 = vmatpush1.bf16.msra.mxu0 0
    %1898 = vmatprep.subr.bf16.mxu0 0
    %1899 = vmatpush1.bf16.msra.mxu0 0
    %1900 = vmatprep.subr.bf16.mxu0 0
    %1901 = vmatpush1.bf16.msra.mxu0 0
    %1902 = vmatprep.subr.bf16.mxu0 0
    %1903 = vmatpush1.bf16.msra.mxu0 0
    %1904 = vmatprep.mubr.bf16.mxu0 0
    %1905 = vmatmul.mubr.bf16.gmra.mrb[0].mxu0 %v1870
    %v1906 = vpop.f32.mrb[0].mxu0
    %v1907 = vadd.f32 0.0, %v1906
    %v1908 = vpop.f32.mrb[0].mxu0
    %v1909 = vpop.f32.mrb[0].mxu0
    %v1910 = vpop.f32.mrb[0].mxu0
    %1911 = vdwg.mxu0
    %v1914 = vunpack.c.l.b16 %v1863
    %v1915 = vunpack.c.l.b16 %v1864
    %v1916 = vrot.slane %v1914, 7
    %v1917 = vrot.slane %v1915, 6
    %v1918 = vsel %vm317, %v1917, %v1916
    %v1919 = vpack.c.b16 %v1918, %v1918
    %1920 = vrot.lane.b32.xlu0 %v1919, 64
    %v1921 = vpop.permute.xlu0 %1920
    %v1923 = vsel %vm172, %v1921, 0
    %1925 = vmatprep.subr.bf16.mxu0 0
    %1926 = vmatpush1.bf16.msra.mxu0 %v98
    %1927 = vmatprep.subr.bf16.mxu0 0
    %1928 = vmatpush1.bf16.msra.mxu0 %v99
    %1929 = vmatprep.subr.bf16.mxu0 0
    %1930 = vmatpush1.bf16.msra.mxu0 0
    %1931 = vmatprep.subr.bf16.mxu0 0
    %1932 = vmatpush1.bf16.msra.mxu0 0
    %1933 = vmatprep.subr.bf16.mxu0 0
    %1934 = vmatpush1.bf16.msra.mxu0 0
    %1935 = vmatprep.subr.bf16.mxu0 0
    %1936 = vmatpush1.bf16.msra.mxu0 0
    %1937 = vmatprep.subr.bf16.mxu0 0
    %1938 = vmatpush1.bf16.msra.mxu0 0
    %1939 = vmatprep.subr.bf16.mxu0 0
    %1940 = vmatpush1.bf16.msra.mxu0 0
    %1941 = vmatprep.subr.bf16.mxu0 0
    %1942 = vmatpush1.bf16.msra.mxu0 0
    %1943 = vmatprep.subr.bf16.mxu0 0
    %1944 = vmatpush1.bf16.msra.mxu0 0
    %1945 = vmatprep.subr.bf16.mxu0 0
    %1946 = vmatpush1.bf16.msra.mxu0 0
    %1947 = vmatprep.subr.bf16.mxu0 0
    %1948 = vmatpush1.bf16.msra.mxu0 0
    %1949 = vmatprep.subr.bf16.mxu0 0
    %1950 = vmatpush1.bf16.msra.mxu0 0
    %1951 = vmatprep.subr.bf16.mxu0 0
    %1952 = vmatpush1.bf16.msra.mxu0 0
    %1953 = vmatprep.subr.bf16.mxu0 0
    %1954 = vmatpush1.bf16.msra.mxu0 0
    %1955 = vmatprep.subr.bf16.mxu0 0
    %1956 = vmatpush1.bf16.msra.mxu0 0
    %1957 = vmatprep.mubr.bf16.mxu0 0
    %1958 = vmatmul.mubr.bf16.gmra.mrb[0].mxu0 %v1923
    %v1959 = vpop.f32.mrb[0].mxu0
    %v1960 = vadd.f32 %v1907, %v1959
    %v1961 = vpop.f32.mrb[0].mxu0
    %v1962 = vpop.f32.mrb[0].mxu0
    %v1963 = vpop.f32.mrb[0].mxu0
    %1964 = vdwg.mxu0
    %v1965 = vadd.f32 %v1960, %v369
    %v1966 = vxor.u32 %v1965, 2147483648
    %v1967 = vmul.f32 %v1966, 1.442695
    %v1968 = vpow.pop %v1967
    %v1969 = vadd.f32 %v1968, 1.0
    %v1970 = vrcp.pop %v1969
    %v1971 = vmul.f32 1.0, %v1970
    %v1972 = vtanh.pop %v1965
    %v1973 = vmul.f32 %v1971, %v1755
    %1975 = vrot.lane.b32.xlu0 %v1972, 32
    %v1976 = vpop.permute.xlu0 %1975
    %v1978 = vmul.f32 %v1971, %v1976
    %1980 = vrot.lane.b32.xlu0 %v1978, 32
    %v1981 = vpop.permute.xlu0 %1980
    %v1983 = vadd.f32 %v1973, %v1981
    %v1984 = vtanh.pop %v1983
    %1986 = vrot.lane.b32.xlu0 %v1984, 32
    %v1987 = vpop.permute.xlu0 %1986
    %v1989 = vmul.f32 %v1971, %v1987
    %v1990 = vld [vmem:[%s7] sm:$0xff]
    %v1991 = vld [vmem:[%s7 + $0x8] sm:$0xff]
    %v1992 = vld [vmem:[%s7 + $0x10] sm:$0xff]
    %v1993 = vld [vmem:[%s7 + $0x18] sm:$0xff]
    %v1994 = vld [vmem:[#allocation8] sm:$0x1]
    %v1996 = vlaneseq
    %v1997 = vshrl.u32 %v1996, 7
    %v1998 = vsub.s32 0, %v1997
    %v1999 = vrot.slane %v1994, %v1998
    %2002 = vrot.lane.b32.xlu0 %v1989, 64
    %v2003 = vpop.permute.xlu0 %2002
    %v2004 = vsel %vm172, %v2003, 0
    %2006 = vmatprep.subr.mxu0 0.0
    %2007 = vmatpush1.msra.mxu0 %v1990
    %2008 = vmatprep.subr.mxu0 0.0
    %2009 = vmatpush1.msra.mxu0 %v1991
    %2010 = vmatprep.subr.mxu0 0.0
    %2011 = vmatpush1.msra.mxu0 %v1992
    %2012 = vmatprep.subr.mxu0 0.0
    %2013 = vmatpush1.msra.mxu0 %v1993
    %2014 = vmatprep.subr.mxu0 0.0
    %2015 = vmatpush1.msra.mxu0 0.0
    %2016 = vmatprep.subr.mxu0 0.0
    %2017 = vmatpush1.msra.mxu0 0.0
    %2018 = vmatprep.subr.mxu0 0.0
    %2019 = vmatpush1.msra.mxu0 0.0
    %2020 = vmatprep.subr.mxu0 0.0
    %2021 = vmatpush1.msra.mxu0 0.0
    %2022 = vmatprep.subr.mxu0 0.0
    %2023 = vmatpush1.msra.mxu0 0.0
    %2024 = vmatprep.subr.mxu0 0.0
    %2025 = vmatpush1.msra.mxu0 0.0
    %2026 = vmatprep.subr.mxu0 0.0
    %2027 = vmatpush1.msra.mxu0 0.0
    %2028 = vmatprep.subr.mxu0 0.0
    %2029 = vmatpush1.msra.mxu0 0.0
    %2030 = vmatprep.subr.mxu0 0.0
    %2031 = vmatpush1.msra.mxu0 0.0
    %2032 = vmatprep.subr.mxu0 0.0
    %2033 = vmatpush1.msra.mxu0 0.0
    %2034 = vmatprep.subr.mxu0 0.0
    %2035 = vmatpush1.msra.mxu0 0.0
    %2036 = vmatprep.subr.mxu0 0.0
    %2037 = vmatpush1.msra.mxu0 0.0
    %2038 = vmatprep.subr.mxu0 0.0
    %2039 = vmatpush1.msra.mxu0 0.0
    %2040 = vmatprep.subr.mxu0 0.0
    %2041 = vmatpush1.msra.mxu0 0.0
    %2042 = vmatprep.subr.mxu0 0.0
    %2043 = vmatpush1.msra.mxu0 0.0
    %2044 = vmatprep.subr.mxu0 0.0
    %2045 = vmatpush1.msra.mxu0 0.0
    %2046 = vmatprep.subr.mxu0 0.0
    %2047 = vmatpush1.msra.mxu0 0.0
    %2048 = vmatprep.subr.mxu0 0.0
    %2049 = vmatpush1.msra.mxu0 0.0
    %2050 = vmatprep.subr.mxu0 0.0
    %2051 = vmatpush1.msra.mxu0 0.0
    %2052 = vmatprep.subr.mxu0 0.0
    %2053 = vmatpush1.msra.mxu0 0.0
    %2054 = vmatprep.subr.mxu0 0.0
    %2055 = vmatpush1.msra.mxu0 0.0
    %2056 = vmatprep.subr.mxu0 0.0
    %2057 = vmatpush1.msra.mxu0 0.0
    %2058 = vmatprep.subr.mxu0 0.0
    %2059 = vmatpush1.msra.mxu0 0.0
    %2060 = vmatprep.subr.mxu0 0.0
    %2061 = vmatpush1.msra.mxu0 0.0
    %2062 = vmatprep.subr.mxu0 0.0
    %2063 = vmatpush1.msra.mxu0 0.0
    %2064 = vmatprep.subr.mxu0 0.0
    %2065 = vmatpush1.msra.mxu0 0.0
    %2066 = vmatprep.subr.mxu0 0.0
    %2067 = vmatpush1.msra.mxu0 0.0
    %2068 = vmatprep.subr.mxu0 0.0
    %2069 = vmatpush1.msra.mxu0 0.0
    %2070 = vmatprep.mubr.f32.mxu0 0.0
    %2071 = vmatmul.mubr.f32.gmra.mrb[0].mxu0 %v2004
    %v2072 = vpop.f32.mrb[0].mxu0
    %v2073 = vadd.f32 %v1999, %v2072
    %v2074 = vpop.f32.mrb[0].mxu0
    %2075 = vdwg.mxu0
    %vm2076 = vcmask 74752
    %2077 = vst.msk [vmem:[#allocation10] sm:$0x3] %vm2076, %v2073
    // Predicated region
    $region54: #{lstm_model_forward.1} parent=1 // pred_check
      _
    $region55: #{lstm_model_forward.1} parent=1 // pred_check_branch
      %2079 = sbr.rel (0) target = $region57
    $region56: #{lstm_model_forward.1} parent=1 // pred_region
      %s2081 = ssub.s32 32, 32
      %2082 = vsyncadd [#allocation4], %s2081
      %s2084 = sshll.u32 [#allocation10], 4
      %s2085 = int_to_ptr.vmem [resolvable:$true] %s2084
      %2087 = dma.vmem_to_hbm [thread:$0]  %s2085, 32, %s9, [#allocation4]
    $region57: #{lstm_model_forward.1} parent=1 // pred_fallthru
      _
    // Predicated region
    $region58: #{lstm_model_forward.1} parent=1 // pred_check
      _
    $region59: #{lstm_model_forward.1} parent=1 // pred_check_branch
      %2089 = sbr.rel (0) target = $region61
    $region60: #{lstm_model_forward.1} parent=1 // pred_region
      %2090 = dma.done [#allocation4], 32
    $region61: #{lstm_model_forward.1} parent=1 // pred_fallthru
      _
    %2091 = vsyncpa [#allocation3], 1
    %2092 = vsyncpa [#allocation6], 1
    %2093 = vsyncpa [#allocation9], 1
    %2094 = vsyncpa [#allocation4], 1

</llo_original>
